<compile_context>
chip_gen: v5e
topology: v5e:2x2
jax: 0.10.0
libtpu: 0.0.40
codegen_flags: <defaults>
</compile_context>

<pallas_src>
import jax
import jax.numpy as jnp
from jax.experimental import pallas as pl
from jax.experimental.pallas import tpu as pltpu


FEAT_DIMS = 128   # slab row offsets below assume FEAT_DIMS == 128


# ---------------------------------------------------------------------------
# Fused kernel: PointNet encoder (3 -> 64 -> 128 -> FEAT, max over points)
#               + FoldingNet decoder (two folding stages over a 2D grid).
# Channel-first throughout: activations are (channels, points) so the point
# dimension sits on the 128-lane axis.
# ---------------------------------------------------------------------------
def _recon_fused_kernel(x_ref, gemb_ref, wa_ref, wb_ref, wc_ref, bias_ref,
                        out_ref, feat_ref):
    bf = jnp.bfloat16
    f32 = jnp.float32

    x = x_ref[0]                                          # (3, N) f32

    # --- unpack packed slabs (static, tile-aligned ref slices) ---
    ew3  = wa_ref[0:128, :]                               # (128, 128) bf16  conv3: 128->FEAT
    w14f = wa_ref[128:384, :]                             # (256, 128) bf16  [w1f ; w4f] merged
    w2   = wa_ref[384:448, :]                             # (64, 128)  bf16
    w5   = wa_ref[448:512, :]                             # (64, 128)  bf16
    ew2  = wb_ref[0:128, :]                               # (128, 64)  bf16
    w3   = wb_ref[128:144, :][0:3]                        # (3, 64)    bf16 (16-row padded slot)
    w6   = wb_ref[144:160, :][0:3]                        # (3, 64)    bf16
    wc   = wc_ref[...]                                    # (192, 3)   f32
    ew1  = wc[0:64]                                       # (64, 3)
    w4p  = wc[64:192]                                     # (128, 3)
    bias = bias_ref[...]                                  # (128, 8)   f32
    eb1, eb2, eb3 = bias[0:64, 0:1], bias[:, 1:2], bias[:, 2:3]
    b2,  b3       = bias[0:64, 3:4], bias[0:3, 4:5]
    b4,  b5,  b6  = bias[:, 5:6],    bias[0:64, 6:7], bias[0:3, 7:8]

    # ----- encoder: shared per-point MLP 3 -> 64 -> 128 -> FEAT -----
    h = (ew1[:, 0:1] * x[0:1, :] + ew1[:, 1:2] * x[1:2, :]
         + ew1[:, 2:3] * x[2:3, :]) + eb1                 # K=3: VPU rank-1 FMAs (f32)
    h = jnp.maximum(h, 0.0)                               # (64, N)
    h = jnp.dot(ew2, h.astype(bf), preferred_element_type=f32) + eb2
    h = jnp.maximum(h, 0.0)                               # (128, N)
    h = jnp.dot(ew3, h.astype(bf), preferred_element_type=f32) + eb3   # (FEAT, N)

    # global max-pool over points; feature stays in VMEM for the decoder
    fcol = jnp.max(h, axis=1, keepdims=True)              # (FEAT, 1) f32
    feat_ref[0] = fcol.T                                  # lane-dense (1, FEAT) store

    # both folding mat-vecs in one MXU push: [fc1 ; fc2] = [w1f ; w4f] @ feat
    fc12 = jnp.dot(w14f, fcol.astype(bf), preferred_element_type=f32)  # (256, 1)
    fc1, fc2 = fc12[0:128], fc12[128:256]

    # ----- folding 1: relu(w1f@feat + (w1g@grid + b1)) -> 64 -> 3 -----
    h = jnp.maximum(fc1 + gemb_ref[...], 0.0)             # (128, M); grid term precomputed
    h = jnp.dot(w2, h.astype(bf), preferred_element_type=f32) + b2
    h = jnp.maximum(h, 0.0)                               # (64, M)
    p1 = jnp.dot(w3, h.astype(bf), preferred_element_type=f32) + b3    # (3, M)

    # ----- folding 2: relu(w4f@feat + w4p@p1 + b4) -> 64 -> 3 -----
    h = (fc2 + w4p[:, 0:1] * p1[0:1, :] + w4p[:, 1:2] * p1[1:2, :]
             + w4p[:, 2:3] * p1[2:3, :]) + b4             # K=3: VPU rank-1 FMAs (f32)
    h = jnp.maximum(h, 0.0)                               # (128, M)
    h = jnp.dot(w5, h.astype(bf), preferred_element_type=f32) + b5
    h = jnp.maximum(h, 0.0)                               # (64, M)
    p2 = jnp.dot(w6, h.astype(bf), preferred_element_type=f32) + b6    # (3, M)

    out_ref[0] = p2                                       # lane-dense (3, M) store


# ---------------------------------------------------------------------------
# Parameter construction (deterministic, synthetic, channel-first: (out, in)).
# MXU weights are stored in bf16; K<=3 weights and biases in f32.
# ---------------------------------------------------------------------------
def init_params(key, feat_dims=FEAT_DIMS):
    def dense(k, shape, scale=0.1, dtype=jnp.float32):
        return (scale * jax.random.normal(k, shape)).astype(dtype)

    bf = jnp.bfloat16
    ks = jax.random.split(key, 20)
    enc = dict(
        w1=dense(ks[0], (64, 3)),                      b1=dense(ks[10], (64, 1), 0.05),
        w2=dense(ks[1], (128, 64), dtype=bf),          b2=dense(ks[11], (128, 1), 0.05),
        w3=dense(ks[2], (feat_dims, 128), dtype=bf),   b3=dense(ks[12], (feat_dims, 1), 0.05),
    )
    dec = dict(
        w1f=dense(ks[3], (128, feat_dims), dtype=bf),  w1g=dense(ks[4], (128, 2)),
        b1=dense(ks[13], (128, 1), 0.05),
        w2=dense(ks[5], (64, 128), dtype=bf),          b2=dense(ks[14], (64, 1), 0.05),
        w3=dense(ks[6], (3, 64), dtype=bf),            b3=dense(ks[15], (3, 1), 0.05),
        w4f=dense(ks[7], (128, feat_dims), dtype=bf),  w4p=dense(ks[8], (128, 3)),
        b4=dense(ks[16], (128, 1), 0.05),
        w5=dense(ks[9], (64, 128), dtype=bf),          b5=dense(ks[17], (64, 1), 0.05),
        w6=dense(ks[18], (3, 64), dtype=bf),           b6=dense(ks[19], (3, 1), 0.05),
    )
    return enc, dec


def make_fold_grid(grid_side=16):
    # fixed 2D folding grid, channel-first (2, M) with M = grid_side**2
    lin = jnp.linspace(-0.5, 0.5, grid_side, dtype=jnp.float32)
    gx, gy = jnp.meshgrid(lin, lin, indexing="ij")
    return jnp.stack([gx.reshape(-1), gy.reshape(-1)], axis=0)   # (2, M)


def pack_params(enc, dec, fold_grid_cm):
    """One-time layout transform: 20 per-layer tensors -> 4 packed slabs plus a
    precomputed grid embedding, so the kernel takes 6 inputs instead of 22."""
    bf, f32 = jnp.bfloat16, jnp.float32

    # Slab A: K=128 MXU weights stacked on rows (bf16):
    #   [0,128) ew3 | [128,384) [w1f;w4f] | [384,448) w2 | [448,512) w5
    slab_a = jnp.concatenate(
        [enc["w3"], dec["w1f"], dec["w4f"], dec["w2"], dec["w5"]], axis=0).astype(bf)

    # Slab B: K=64 MXU weights (bf16); 3-row pieces padded to 16-row slots so every
    # segment starts on a bf16 sublane-tile boundary:
    #   [0,128) ew2 | [128,144) w3 (3 rows used) | [144,160) w6 (3 rows used)
    pad13 = jnp.zeros((13, 64), bf)
    slab_b = jnp.concatenate(
        [enc["w2"].astype(bf), dec["w3"].astype(bf), pad13,
         dec["w6"].astype(bf), pad13], axis=0)                       # (160, 64)

    # Slab C: K<=3 rank-1 (VPU) weights, f32:  [0,64) ew1 | [64,192) w4p
    slab_c = jnp.concatenate([enc["w1"], dec["w4p"]], axis=0)        # (192, 3)

    # Slab D: biases as columns of one (128, 8) f32 array.
    def col(b):
        return jnp.pad(b, ((0, 128 - b.shape[0]), (0, 0)))
    slab_bias = jnp.concatenate(
        [col(enc["b1"]), col(enc["b2"]), col(enc["b3"]),
         col(dec["b2"]), col(dec["b3"]), col(dec["b4"]),
         col(dec["b5"]), col(dec["b6"])], axis=1)                    # (128, 8)

    # Batch-independent fold-1 grid embedding, hoisted out of the kernel.
    g_emb = (jnp.dot(dec["w1g"], fold_grid_cm,
                     precision=jax.lax.Precision.HIGHEST) + dec["b1"]).astype(f32)  # (128, M)

    return slab_a, slab_b, slab_c, slab_bias, g_emb


# ---------------------------------------------------------------------------
# Wrapper: ReconstructionNet.forward(input) -> (output, feature)
# ---------------------------------------------------------------------------
@jax.jit
def reconstruction_net_forward(x_bcn, slab_a, slab_b, slab_c, slab_bias, g_emb):
    """x_bcn: (B, 3, N) float32, PyTorch channel-first point cloud."""
    B, _, N = x_bcn.shape
    F = slab_a.shape[1]
    M = g_emb.shape[1]

    full = lambda a: pl.BlockSpec(a.shape, lambda i, nd=a.ndim: (0,) * nd)

    out, feat = pl.pallas_call(
        _recon_fused_kernel,
        out_shape=(jax.ShapeDtypeStruct((B, 3, M), jnp.float32),
                   jax.ShapeDtypeStruct((B, 1, F), jnp.float32)),
        grid=(B,),
        in_specs=[pl.BlockSpec((1, 3, N), lambda i: (i, 0, 0)),
                  full(g_emb), full(slab_a), full(slab_b),
                  full(slab_c), full(slab_bias)],
        out_specs=(pl.BlockSpec((1, 3, M), lambda i: (i, 0, 0)),
                   pl.BlockSpec((1, 1, F), lambda i: (i, 0, 0))),
        compiler_params=pltpu.CompilerParams(dimension_semantics=("parallel",)),
    )(x_bcn, g_emb, slab_a, slab_b, slab_c, slab_bias)

    # args.no_vae == True -> feature passes through unchanged (mu/std are None)
    return out, feat[:, 0, :]                              # (B, 3, M), (B, FEAT)


# ---------------------------------------------------------------------------
# Pure-JAX reference for the correctness check. Mirrors the kernel's mixed
# precision (bf16 weights + bf16 MXU-side activations, f32 accumulation;
# K<=3 paths and biases in f32).
# ---------------------------------------------------------------------------
def _reference_forward(x_bcn, enc, dec, grid_cm):
    hp = jax.lax.Precision.HIGHEST
    bf, f32 = jnp.bfloat16, jnp.float32

    def mxu(w, h, b):                 # w: (O,I) bf16, h: (B,I,N) f32, b: (O,1) f32
        return jnp.einsum("oi,bin->bon", w, h.astype(bf),
                          preferred_element_type=f32) + b[None]

    h = jnp.maximum(jnp.einsum("oi,bin->bon", enc["w1"], x_bcn, precision=hp)
                    + enc["b1"][None], 0.0)
    h = jnp.maximum(mxu(enc["w2"], h, enc["b2"]), 0.0)
    h = mxu(enc["w3"], h, enc["b3"])
    feat = jnp.max(h, axis=-1)                              # (B, FEAT)

    g_emb = jnp.dot(dec["w1g"], grid_cm, precision=hp) + dec["b1"]     # (128, M)
    fb = feat.astype(bf)
    fc1 = jnp.einsum("oi,bi->bo", dec["w1f"], fb,
                     preferred_element_type=f32)[:, :, None]
    h = jnp.maximum(fc1 + g_emb[None], 0.0)
    h = jnp.maximum(mxu(dec["w2"], h, dec["b2"]), 0.0)
    p1 = mxu(dec["w3"], h, dec["b3"])
    fc2 = jnp.einsum("oi,bi->bo", dec["w4f"], fb,
                     preferred_element_type=f32)[:, :, None]
    h = jnp.maximum(fc2 + jnp.einsum("oi,bin->bon", dec["w4p"], p1, precision=hp)
                    + dec["b4"][None], 0.0)
    h = jnp.maximum(mxu(dec["w5"], h, dec["b5"]), 0.0)
    p2 = mxu(dec["w6"], h, dec["b6"])
    return p2, feat


if __name__ == "__main__":
    key = jax.random.PRNGKey(0)
    k_x, k_p = jax.random.split(key)

    B, N = 2, 128                 # 2 clouds of 128 (x, y, z) points
    x = jax.random.normal(k_x, (B, 3, N), dtype=jnp.float32)

    enc, dec = init_params(k_p, feat_dims=FEAT_DIMS)
    fold_grid = make_fold_grid(grid_side=16)                # (2, 256): M = 256 folded points

    slabs = pack_params(enc, dec, fold_grid)                # one-time weight-layout transform
    out, feat = reconstruction_net_forward(x, *slabs)
    out, feat = jax.block_until_ready((out, feat))

    ref_out, ref_feat = _reference_forward(x, enc, dec, fold_grid)
    assert out.shape == (B, 3, fold_grid.shape[1])
    assert feat.shape == (B, FEAT_DIMS)
    # bf16 mixed precision in both kernel and reference -> only accumulation-order noise.
    assert jnp.allclose(out, ref_out, atol=2e-3, rtol=2e-3)
    assert jnp.allclose(feat, ref_feat, atol=2e-3, rtol=2e-3)

    print("KERNEL_OK")
</pallas_src>

<mosaic_0001>
module attributes {stable_mosaic.version = 11 : i64} {
  func.func @_recon_fused_kernel(%arg0: i32, %arg1: memref<1x3x128xf32, #tpu.memory_space<vmem>>, %arg2: memref<128x256xf32, #tpu.memory_space<vmem>>, %arg3: memref<512x128xbf16, #tpu.memory_space<vmem>>, %arg4: memref<160x64xbf16, #tpu.memory_space<vmem>>, %arg5: memref<192x3xf32, #tpu.memory_space<vmem>>, %arg6: memref<128x8xf32, #tpu.memory_space<vmem>>, %arg7: memref<1x3x256xf32, #tpu.memory_space<vmem>>, %arg8: memref<1x1x128xf32, #tpu.memory_space<vmem>>) attributes {dimension_semantics = [#tpu.dimension_semantics<parallel>], iteration_bounds = array<i64: 2>, scalar_prefetch = 0 : i64, scratch_operands = 0 : i64, tpu.core_type = #tpu.core_type<tc>, window_params = [{transform_indices = @transform_0, window_bounds = array<i64: 1, 3, 128>}, {pipeline_mode = #tpu.pipeline_mode<synchronous>, transform_indices = @transform_1, window_bounds = array<i64: 128, 256>}, {pipeline_mode = #tpu.pipeline_mode<synchronous>, transform_indices = @transform_2, window_bounds = array<i64: 512, 128>}, {pipeline_mode = #tpu.pipeline_mode<synchronous>, transform_indices = @transform_3, window_bounds = array<i64: 160, 64>}, {pipeline_mode = #tpu.pipeline_mode<synchronous>, transform_indices = @transform_4, window_bounds = array<i64: 192, 3>}, {pipeline_mode = #tpu.pipeline_mode<synchronous>, transform_indices = @transform_5, window_bounds = array<i64: 128, 8>}, {transform_indices = @transform_6, window_bounds = array<i64: 1, 3, 256>}, {transform_indices = @transform_7, window_bounds = array<i64: 1, 1, 128>}]} {
    %c0 = arith.constant 0 : index
    %c0_0 = arith.constant 0 : index
    %c0_1 = arith.constant 0 : index
    %0 = vector.load %arg1[%c0, %c0_0, %c0_1] : memref<1x3x128xf32, #tpu.memory_space<vmem>>, vector<1x3x128xf32>
    %1 = vector.shape_cast %0 : vector<1x3x128xf32> to vector<3x128xf32>
    %c0_2 = arith.constant 0 : index
    %c0_3 = arith.constant 0 : index
    %2 = vector.load %arg3[%c0_2, %c0_3] : memref<512x128xbf16, #tpu.memory_space<vmem>>, vector<128x128xbf16>
    %c128 = arith.constant 128 : index
    %c0_4 = arith.constant 0 : index
    %3 = vector.load %arg3[%c128, %c0_4] : memref<512x128xbf16, #tpu.memory_space<vmem>>, vector<256x128xbf16>
    %c384 = arith.constant 384 : index
    %c0_5 = arith.constant 0 : index
    %4 = vector.load %arg3[%c384, %c0_5] : memref<512x128xbf16, #tpu.memory_space<vmem>>, vector<64x128xbf16>
    %c448 = arith.constant 448 : index
    %c0_6 = arith.constant 0 : index
    %5 = vector.load %arg3[%c448, %c0_6] : memref<512x128xbf16, #tpu.memory_space<vmem>>, vector<64x128xbf16>
    %c0_7 = arith.constant 0 : index
    %c0_8 = arith.constant 0 : index
    %6 = vector.load %arg4[%c0_7, %c0_8] : memref<160x64xbf16, #tpu.memory_space<vmem>>, vector<128x64xbf16>
    %c128_9 = arith.constant 128 : index
    %c0_10 = arith.constant 0 : index
    %7 = vector.load %arg4[%c128_9, %c0_10] : memref<160x64xbf16, #tpu.memory_space<vmem>>, vector<16x64xbf16>
    %8 = vector.extract_strided_slice %7 {offsets = [0, 0], sizes = [3, 64], strides = [1, 1]} : vector<16x64xbf16> to vector<3x64xbf16>
    %c144 = arith.constant 144 : index
    %c0_11 = arith.constant 0 : index
    %9 = vector.load %arg4[%c144, %c0_11] : memref<160x64xbf16, #tpu.memory_space<vmem>>, vector<16x64xbf16>
    %10 = vector.extract_strided_slice %9 {offsets = [0, 0], sizes = [3, 64], strides = [1, 1]} : vector<16x64xbf16> to vector<3x64xbf16>
    %c0_12 = arith.constant 0 : index
    %c0_13 = arith.constant 0 : index
    %11 = vector.load %arg5[%c0_12, %c0_13] : memref<192x3xf32, #tpu.memory_space<vmem>>, vector<192x3xf32>
    %12 = vector.extract_strided_slice %11 {offsets = [0, 0], sizes = [64, 3], strides = [1, 1]} : vector<192x3xf32> to vector<64x3xf32>
    %13 = vector.extract_strided_slice %11 {offsets = [64, 0], sizes = [128, 3], strides = [1, 1]} : vector<192x3xf32> to vector<128x3xf32>
    %c0_14 = arith.constant 0 : index
    %c0_15 = arith.constant 0 : index
    %14 = vector.load %arg6[%c0_14, %c0_15] : memref<128x8xf32, #tpu.memory_space<vmem>>, vector<128x8xf32>
    %15 = vector.extract_strided_slice %14 {offsets = [0, 0], sizes = [64, 1], strides = [1, 1]} : vector<128x8xf32> to vector<64x1xf32>
    %16 = vector.extract_strided_slice %14 {offsets = [0, 1], sizes = [128, 1], strides = [1, 1]} : vector<128x8xf32> to vector<128x1xf32>
    %17 = vector.extract_strided_slice %14 {offsets = [0, 2], sizes = [128, 1], strides = [1, 1]} : vector<128x8xf32> to vector<128x1xf32>
    %18 = vector.extract_strided_slice %14 {offsets = [0, 3], sizes = [64, 1], strides = [1, 1]} : vector<128x8xf32> to vector<64x1xf32>
    %19 = vector.extract_strided_slice %14 {offsets = [0, 4], sizes = [3, 1], strides = [1, 1]} : vector<128x8xf32> to vector<3x1xf32>
    %20 = vector.extract_strided_slice %14 {offsets = [0, 5], sizes = [128, 1], strides = [1, 1]} : vector<128x8xf32> to vector<128x1xf32>
    %21 = vector.extract_strided_slice %14 {offsets = [0, 6], sizes = [64, 1], strides = [1, 1]} : vector<128x8xf32> to vector<64x1xf32>
    %22 = vector.extract_strided_slice %14 {offsets = [0, 7], sizes = [3, 1], strides = [1, 1]} : vector<128x8xf32> to vector<3x1xf32>
    %23 = vector.extract_strided_slice %12 {offsets = [0, 0], sizes = [64, 1], strides = [1, 1]} : vector<64x3xf32> to vector<64x1xf32>
    %24 = vector.extract_strided_slice %1 {offsets = [0, 0], sizes = [1, 128], strides = [1, 1]} : vector<3x128xf32> to vector<1x128xf32>
    %25 = vector.broadcast %23 : vector<64x1xf32> to vector<64x128xf32>
    %26 = vector.broadcast %24 : vector<1x128xf32> to vector<64x128xf32>
    %27 = arith.mulf %25, %26 : vector<64x128xf32>
    %28 = vector.extract_strided_slice %12 {offsets = [0, 1], sizes = [64, 1], strides = [1, 1]} : vector<64x3xf32> to vector<64x1xf32>
    %29 = vector.extract_strided_slice %1 {offsets = [1, 0], sizes = [1, 128], strides = [1, 1]} : vector<3x128xf32> to vector<1x128xf32>
    %30 = vector.broadcast %28 : vector<64x1xf32> to vector<64x128xf32>
    %31 = vector.broadcast %29 : vector<1x128xf32> to vector<64x128xf32>
    %32 = arith.mulf %30, %31 : vector<64x128xf32>
    %33 = arith.addf %27, %32 : vector<64x128xf32>
    %34 = vector.extract_strided_slice %12 {offsets = [0, 2], sizes = [64, 1], strides = [1, 1]} : vector<64x3xf32> to vector<64x1xf32>
    %35 = vector.extract_strided_slice %1 {offsets = [2, 0], sizes = [1, 128], strides = [1, 1]} : vector<3x128xf32> to vector<1x128xf32>
    %36 = vector.broadcast %34 : vector<64x1xf32> to vector<64x128xf32>
    %37 = vector.broadcast %35 : vector<1x128xf32> to vector<64x128xf32>
    %38 = arith.mulf %36, %37 : vector<64x128xf32>
    %39 = arith.addf %33, %38 : vector<64x128xf32>
    %40 = vector.broadcast %15 : vector<64x1xf32> to vector<64x128xf32>
    %41 = arith.addf %39, %40 : vector<64x128xf32>
    %cst = arith.constant 0.000000e+00 : f32
    %42 = vector.broadcast %cst : f32 to vector<64x128xf32>
    %43 = arith.maximumf %41, %42 : vector<64x128xf32>
    %44 = arith.truncf %43 : vector<64x128xf32> to vector<64x128xbf16>
    %cst_16 = arith.constant dense<0.000000e+00> : vector<128x128xf32>
    %45 = tpu.matmul %6, %44, %cst_16 {dimension_numbers = #tpu.dot_dimension_numbers<[1], [0], [0], [1], [0, 0, 1, 1], [], []>} : vector<128x64xbf16>, vector<64x128xbf16>, vector<128x128xf32> -> vector<128x128xf32>
    %46 = vector.broadcast %16 : vector<128x1xf32> to vector<128x128xf32>
    %47 = arith.addf %45, %46 : vector<128x128xf32>
    %cst_17 = arith.constant 0.000000e+00 : f32
    %48 = vector.broadcast %cst_17 : f32 to vector<128x128xf32>
    %49 = arith.maximumf %47, %48 : vector<128x128xf32>
    %50 = arith.truncf %49 : vector<128x128xf32> to vector<128x128xbf16>
    %cst_18 = arith.constant dense<0.000000e+00> : vector<128x128xf32>
    %51 = tpu.matmul %2, %50, %cst_18 {dimension_numbers = #tpu.dot_dimension_numbers<[1], [0], [0], [1], [0, 0, 1, 1], [], []>} : vector<128x128xbf16>, vector<128x128xbf16>, vector<128x128xf32> -> vector<128x128xf32>
    %52 = vector.broadcast %17 : vector<128x1xf32> to vector<128x128xf32>
    %53 = arith.addf %51, %52 : vector<128x128xf32>
    %cst_19 = arith.constant dense<0xFF800000> : vector<128xf32>
    %54 = vector.multi_reduction <maximumf>, %53, %cst_19 [1] : vector<128x128xf32> to vector<128xf32>
    %55 = vector.shape_cast %54 : vector<128xf32> to vector<128x1xf32>
    %56 = tpu.transpose %55, [1, 0] : vector<128x1xf32> -> vector<1x128xf32>
    %c0_20 = arith.constant 0 : index
    %c0_21 = arith.constant 0 : index
    %c0_22 = arith.constant 0 : index
    %57 = vector.load %arg8[%c0_20, %c0_21, %c0_22] : memref<1x1x128xf32, #tpu.memory_space<vmem>>, vector<1x1x128xf32>
    %58 = vector.shape_cast %57 : vector<1x1x128xf32> to vector<1x128xf32>
    %59 = vector.shape_cast %56 : vector<1x128xf32> to vector<1x1x128xf32>
    tpu.vector_store %arg8[%c0_20, %c0_21, %c0_22], %59 {strides = array<i32>} : memref<1x1x128xf32, #tpu.memory_space<vmem>>, vector<1x1x128xf32>,
    %60 = arith.truncf %55 : vector<128x1xf32> to vector<128x1xbf16>
    %cst_23 = arith.constant dense<0.000000e+00> : vector<256x1xf32>
    %61 = tpu.matmul %3, %60, %cst_23 {dimension_numbers = #tpu.dot_dimension_numbers<[1], [0], [0], [1], [0, 0, 1, 1], [], []>} : vector<256x128xbf16>, vector<128x1xbf16>, vector<256x1xf32> -> vector<256x1xf32>
    %62 = vector.extract_strided_slice %61 {offsets = [0, 0], sizes = [128, 1], strides = [1, 1]} : vector<256x1xf32> to vector<128x1xf32>
    %63 = vector.extract_strided_slice %61 {offsets = [128, 0], sizes = [128, 1], strides = [1, 1]} : vector<256x1xf32> to vector<128x1xf32>
    %c0_24 = arith.constant 0 : index
    %c0_25 = arith.constant 0 : index
    %64 = vector.load %arg2[%c0_24, %c0_25] : memref<128x256xf32, #tpu.memory_space<vmem>>, vector<128x256xf32>
    %65 = vector.broadcast %62 : vector<128x1xf32> to vector<128x256xf32>
    %66 = arith.addf %65, %64 : vector<128x256xf32>
    %cst_26 = arith.constant 0.000000e+00 : f32
    %67 = vector.broadcast %cst_26 : f32 to vector<128x256xf32>
    %68 = arith.maximumf %66, %67 : vector<128x256xf32>
    %69 = arith.truncf %68 : vector<128x256xf32> to vector<128x256xbf16>
    %cst_27 = arith.constant dense<0.000000e+00> : vector<64x256xf32>
    %70 = tpu.matmul %4, %69, %cst_27 {dimension_numbers = #tpu.dot_dimension_numbers<[1], [0], [0], [1], [0, 0, 1, 1], [], []>} : vector<64x128xbf16>, vector<128x256xbf16>, vector<64x256xf32> -> vector<64x256xf32>
    %71 = vector.broadcast %18 : vector<64x1xf32> to vector<64x256xf32>
    %72 = arith.addf %70, %71 : vector<64x256xf32>
    %cst_28 = arith.constant 0.000000e+00 : f32
    %73 = vector.broadcast %cst_28 : f32 to vector<64x256xf32>
    %74 = arith.maximumf %72, %73 : vector<64x256xf32>
    %75 = arith.truncf %74 : vector<64x256xf32> to vector<64x256xbf16>
    %cst_29 = arith.constant dense<0.000000e+00> : vector<3x256xf32>
    %76 = tpu.matmul %8, %75, %cst_29 {dimension_numbers = #tpu.dot_dimension_numbers<[1], [0], [0], [1], [0, 0, 1, 1], [], []>} : vector<3x64xbf16>, vector<64x256xbf16>, vector<3x256xf32> -> vector<3x256xf32>
    %77 = vector.broadcast %19 : vector<3x1xf32> to vector<3x256xf32>
    %78 = arith.addf %76, %77 : vector<3x256xf32>
    %79 = vector.extract_strided_slice %13 {offsets = [0, 0], sizes = [128, 1], strides = [1, 1]} : vector<128x3xf32> to vector<128x1xf32>
    %80 = vector.extract_strided_slice %78 {offsets = [0, 0], sizes = [1, 256], strides = [1, 1]} : vector<3x256xf32> to vector<1x256xf32>
    %81 = vector.broadcast %79 : vector<128x1xf32> to vector<128x256xf32>
    %82 = vector.broadcast %80 : vector<1x256xf32> to vector<128x256xf32>
    %83 = arith.mulf %81, %82 : vector<128x256xf32>
    %84 = vector.broadcast %63 : vector<128x1xf32> to vector<128x256xf32>
    %85 = arith.addf %84, %83 : vector<128x256xf32>
    %86 = vector.extract_strided_slice %13 {offsets = [0, 1], sizes = [128, 1], strides = [1, 1]} : vector<128x3xf32> to vector<128x1xf32>
    %87 = vector.extract_strided_slice %78 {offsets = [1, 0], sizes = [1, 256], strides = [1, 1]} : vector<3x256xf32> to vector<1x256xf32>
    %88 = vector.broadcast %86 : vector<128x1xf32> to vector<128x256xf32>
    %89 = vector.broadcast %87 : vector<1x256xf32> to vector<128x256xf32>
    %90 = arith.mulf %88, %89 : vector<128x256xf32>
    %91 = arith.addf %85, %90 : vector<128x256xf32>
    %92 = vector.extract_strided_slice %13 {offsets = [0, 2], sizes = [128, 1], strides = [1, 1]} : vector<128x3xf32> to vector<128x1xf32>
    %93 = vector.extract_strided_slice %78 {offsets = [2, 0], sizes = [1, 256], strides = [1, 1]} : vector<3x256xf32> to vector<1x256xf32>
    %94 = vector.broadcast %92 : vector<128x1xf32> to vector<128x256xf32>
    %95 = vector.broadcast %93 : vector<1x256xf32> to vector<128x256xf32>
    %96 = arith.mulf %94, %95 : vector<128x256xf32>
    %97 = arith.addf %91, %96 : vector<128x256xf32>
    %98 = vector.broadcast %20 : vector<128x1xf32> to vector<128x256xf32>
    %99 = arith.addf %97, %98 : vector<128x256xf32>
    %cst_30 = arith.constant 0.000000e+00 : f32
    %100 = vector.broadcast %cst_30 : f32 to vector<128x256xf32>
    %101 = arith.maximumf %99, %100 : vector<128x256xf32>
    %102 = arith.truncf %101 : vector<128x256xf32> to vector<128x256xbf16>
    %cst_31 = arith.constant dense<0.000000e+00> : vector<64x256xf32>
    %103 = tpu.matmul %5, %102, %cst_31 {dimension_numbers = #tpu.dot_dimension_numbers<[1], [0], [0], [1], [0, 0, 1, 1], [], []>} : vector<64x128xbf16>, vector<128x256xbf16>, vector<64x256xf32> -> vector<64x256xf32>
    %104 = vector.broadcast %21 : vector<64x1xf32> to vector<64x256xf32>
    %105 = arith.addf %103, %104 : vector<64x256xf32>
    %cst_32 = arith.constant 0.000000e+00 : f32
    %106 = vector.broadcast %cst_32 : f32 to vector<64x256xf32>
    %107 = arith.maximumf %105, %106 : vector<64x256xf32>
    %108 = arith.truncf %107 : vector<64x256xf32> to vector<64x256xbf16>
    %cst_33 = arith.constant dense<0.000000e+00> : vector<3x256xf32>
    %109 = tpu.matmul %10, %108, %cst_33 {dimension_numbers = #tpu.dot_dimension_numbers<[1], [0], [0], [1], [0, 0, 1, 1], [], []>} : vector<3x64xbf16>, vector<64x256xbf16>, vector<3x256xf32> -> vector<3x256xf32>
    %110 = vector.broadcast %22 : vector<3x1xf32> to vector<3x256xf32>
    %111 = arith.addf %109, %110 : vector<3x256xf32>
    %c0_34 = arith.constant 0 : index
    %c0_35 = arith.constant 0 : index
    %c0_36 = arith.constant 0 : index
    %112 = vector.load %arg7[%c0_34, %c0_35, %c0_36] : memref<1x3x256xf32, #tpu.memory_space<vmem>>, vector<1x3x256xf32>
    %113 = vector.shape_cast %112 : vector<1x3x256xf32> to vector<3x256xf32>
    %114 = vector.shape_cast %111 : vector<3x256xf32> to vector<1x3x256xf32>
    tpu.vector_store %arg7[%c0_34, %c0_35, %c0_36], %114 {strides = array<i32>} : memref<1x3x256xf32, #tpu.memory_space<vmem>>, vector<1x3x256xf32>,
    return
  }
  func.func @transform_0(%arg0: i32) -> (i32, i32, i32) {
    %c0_i32 = arith.constant 0 : i32
    %c0_i32_0 = arith.constant 0 : i32
    %c0_i32_1 = arith.constant 0 : i32
    return %arg0, %c0_i32, %c0_i32_0 : i32, i32, i32
  }
  func.func @transform_1(%arg0: i32) -> (i32, i32) {
    %c0_i32 = arith.constant 0 : i32
    %c0_i32_0 = arith.constant 0 : i32
    %c0_i32_1 = arith.constant 0 : i32
    return %c0_i32, %c0_i32_0 : i32, i32
  }
  func.func @transform_2(%arg0: i32) -> (i32, i32) {
    %c0_i32 = arith.constant 0 : i32
    %c0_i32_0 = arith.constant 0 : i32
    %c0_i32_1 = arith.constant 0 : i32
    return %c0_i32, %c0_i32_0 : i32, i32
  }
  func.func @transform_3(%arg0: i32) -> (i32, i32) {
    %c0_i32 = arith.constant 0 : i32
    %c0_i32_0 = arith.constant 0 : i32
    %c0_i32_1 = arith.constant 0 : i32
    return %c0_i32, %c0_i32_0 : i32, i32
  }
  func.func @transform_4(%arg0: i32) -> (i32, i32) {
    %c0_i32 = arith.constant 0 : i32
    %c0_i32_0 = arith.constant 0 : i32
    %c0_i32_1 = arith.constant 0 : i32
    return %c0_i32, %c0_i32_0 : i32, i32
  }
  func.func @transform_5(%arg0: i32) -> (i32, i32) {
    %c0_i32 = arith.constant 0 : i32
    %c0_i32_0 = arith.constant 0 : i32
    %c0_i32_1 = arith.constant 0 : i32
    return %c0_i32, %c0_i32_0 : i32, i32
  }
  func.func @transform_6(%arg0: i32) -> (i32, i32, i32) {
    %c0_i32 = arith.constant 0 : i32
    %c0_i32_0 = arith.constant 0 : i32
    %c0_i32_1 = arith.constant 0 : i32
    return %arg0, %c0_i32, %c0_i32_0 : i32, i32, i32
  }
  func.func @transform_7(%arg0: i32) -> (i32, i32, i32) {
    %c0_i32 = arith.constant 0 : i32
    %c0_i32_0 = arith.constant 0 : i32
    %c0_i32_1 = arith.constant 0 : i32
    return %arg0, %c0_i32, %c0_i32_0 : i32, i32, i32
  }
}

</mosaic_0001>

<llo_original>
// kernel: reconstruction_net_forward.1
$region0: #{reconstruction_net_forward.1}
  #allocation0 [shape = 'u32[]', space=smem, size = 0x4, offset = 0x4, fixed_abs, tag = 'smem constant byte address 0x4 - core index']
  #allocation1 [shape = 'u32[72,128]{1,0:T(1,128)}', space=vmem, size = 0x9000, scoped, tag = 'internal scratch']
  %s0 = inlined_call_operand.vmem [shape: f32[2,3,128], index: 0, kind: input, shape index: {}]
  %s1 = inlined_call_operand.vmem [shape: f32[128,256], index: 1, kind: input, shape index: {}]
  %s2 = inlined_call_operand.hbm [shape: bf16[512,128], index: 2, kind: input, shape index: {}]
  %s3 = inlined_call_operand.vmem [shape: bf16[160,64], index: 3, kind: input, shape index: {}]
  %s4 = inlined_call_operand.vmem [shape: f32[192,3], index: 4, kind: input, shape index: {}]
  %s5 = inlined_call_operand.vmem [shape: f32[128,8], index: 5, kind: input, shape index: {}]
  %s6 = inlined_call_operand.vmem [shape: f32[2,3,256], index: 6, kind: output, shape index: {0}]
  %s7 = inlined_call_operand.hbm [shape: f32[2,1,128], index: 7, kind: output, shape index: {1}]
  %8 = xla_tuple %s6, %s7
  %s9 = sld [smem:[#allocation0]]
  $region69: #{reconstruction_net_forward.1} parent=0
    _
  %s11 = ssub.s32 1, %s9
  %s12 = scalar_select 0, %s11, %s9
  $region1: #{reconstruction_net_forward.1} parent=0
    #allocation2 [shape = 'u8[131072]{0}', space=vmem, size = 0x20000, scoped, tag = 'input window, operand 2, single buffered']
    #allocation3 [shape = 's32[2]{0}', space=sflag, size = 0x8, scoped, tag = 'scoped memory for reconstruction_net_forward.1']
    #allocation4 [shape = 's32[2]{0}', space=sflag, size = 0x8, scoped, tag = 'scoped memory for reconstruction_net_forward.1']
    #allocation5 [shape = 'u8[1024]{0}', space=vmem, size = 0x400, scoped, tag = 'output window, operand 1']
    %13 = vsyncpa [#allocation3], 0
    %14 = vsyncpa [#allocation4], 0
    %s15 = scalar_lea.sflag [#allocation4], 1
    %16 = vsyncpa %s15, 0
    loop: start=0, step=1, limit=4
    $region2: #{reconstruction_net_forward.1} parent=1 // loop_pre_header
      _
    $region3: #{reconstruction_net_forward.1} parent=1 // loop_header
      %s18 = sphi 0, %s22
      %p19 = scmp.ge.s32.totalorder %s18, 4
      %s28 = sphi 0, %s30
      %s31 = sphi 0, %s28
      %s32 = sphi 0, %s31
      %s48 = sphi 0, %s32
      %s52 = sphi 0, %s52
      %s54 = sphi 0, %s52
      %s55 = sphi 0, %s54
      %s69 = sphi 0, %s55
      %s73 = sphi 0, %s73
      %s75 = sphi 0, %s73
      %s76 = sphi 0, %s75
      %s90 = sphi 0, %s76
      %s94 = sphi 0, %s94
      %s96 = sphi 0, %s94
      %s97 = sphi 0, %s96
      %s111 = sphi 0, %s97
      %s115 = sphi 0, %s115
      %s117 = sphi 0, %s115
      %s118 = sphi 0, %s117
      %s132 = sphi 0, %s118
      %s136 = sphi 0, %s136
      %s138 = sphi 0, %s136
      %s139 = sphi 0, %s138
      %s153 = sphi 0, %s139
      %s159 = sphi 0, %s161
      %s162 = sphi 0, %s159
      %s163 = sphi 0, %s162
      %s179 = sphi 0, %s163
      %s185 = sphi 0, %s187
      %s188 = sphi 0, %s185
      %s189 = sphi 0, %s188
      %s205 = sphi 0, %s189
    $region4: #{reconstruction_net_forward.1} parent=1 // loop_header_branch
      %21 = sbr.rel (%p19) target = $region8
    $region5: #{reconstruction_net_forward.1} parent=1 // loop_body
      %s23 = ssub.s32 %s18, 1
      %s24 = ssub.s32 %s18, 2
      %s25 = sadd.s32 %s18, 1
      %s26 = ssub.s32 %s18, %s25
      %p27 = scmp.eq.s32.totalorder %s26, 0
      %s29 = sadd.s32 %s28, 1
      %s30 = scalar_select %p27, %s28, %s29
      %p33 = pneg %p27
      %p34 = scmp.eq.s32.totalorder %s18, 1
      %p35 = por %p33, %p34
      %p36 = scmp.ne.s32.totalorder %s28, %s31
      %p37 = scmp.eq.s32.totalorder %s18, 0
      %p38 = por %p36, %p37
      %p39 = scmp.ne.s32.totalorder %s28, %s31
      %p40 = scmp.eq.s32.totalorder %s23, 1
      %p41 = por %p39, %p40
      %p42 = scmp.ne.s32.totalorder %s31, %s32
      %p43 = scmp.eq.s32.totalorder %s23, 0
      %p44 = por %p42, %p43
      %p45 = scmp.ne.s32.totalorder %s31, %s32
      %p46 = scmp.eq.s32.totalorder %s24, 1
      %p47 = por %p45, %p46
      %p49 = scmp.ne.s32.totalorder %s32, %s48
      %p50 = scmp.eq.s32.totalorder %s24, 0
      %p51 = por %p49, %p50
      %s53 = sadd.s32 %s52, 1
      %p56 = scmp.eq.s32.totalorder %s18, 1
      %p57 = scmp.ne.s32.totalorder %s52, %s54
      %p58 = scmp.eq.s32.totalorder %s18, 0
      %p59 = por %p57, %p58
      %p60 = scmp.ne.s32.totalorder %s52, %s54
      %p61 = scmp.eq.s32.totalorder %s23, 1
      %p62 = por %p60, %p61
      %p63 = scmp.ne.s32.totalorder %s54, %s55
      %p64 = scmp.eq.s32.totalorder %s23, 0
      %p65 = por %p63, %p64
      %p66 = scmp.ne.s32.totalorder %s54, %s55
      %p67 = scmp.eq.s32.totalorder %s24, 1
      %p68 = por %p66, %p67
      %p70 = scmp.ne.s32.totalorder %s55, %s69
      %p71 = scmp.eq.s32.totalorder %s24, 0
      %p72 = por %p70, %p71
      %s74 = sadd.s32 %s73, 1
      %p77 = scmp.eq.s32.totalorder %s18, 1
      %p78 = scmp.ne.s32.totalorder %s73, %s75
      %p79 = scmp.eq.s32.totalorder %s18, 0
      %p80 = por %p78, %p79
      %p81 = scmp.ne.s32.totalorder %s73, %s75
      %p82 = scmp.eq.s32.totalorder %s23, 1
      %p83 = por %p81, %p82
      %p84 = scmp.ne.s32.totalorder %s75, %s76
      %p85 = scmp.eq.s32.totalorder %s23, 0
      %p86 = por %p84, %p85
      %p87 = scmp.ne.s32.totalorder %s75, %s76
      %p88 = scmp.eq.s32.totalorder %s24, 1
      %p89 = por %p87, %p88
      %p91 = scmp.ne.s32.totalorder %s76, %s90
      %p92 = scmp.eq.s32.totalorder %s24, 0
      %p93 = por %p91, %p92
      %s95 = sadd.s32 %s94, 1
      %p98 = scmp.eq.s32.totalorder %s18, 1
      %p99 = scmp.ne.s32.totalorder %s94, %s96
      %p100 = scmp.eq.s32.totalorder %s18, 0
      %p101 = por %p99, %p100
      %p102 = scmp.ne.s32.totalorder %s94, %s96
      %p103 = scmp.eq.s32.totalorder %s23, 1
      %p104 = por %p102, %p103
      %p105 = scmp.ne.s32.totalorder %s96, %s97
      %p106 = scmp.eq.s32.totalorder %s23, 0
      %p107 = por %p105, %p106
      %p108 = scmp.ne.s32.totalorder %s96, %s97
      %p109 = scmp.eq.s32.totalorder %s24, 1
      %p110 = por %p108, %p109
      %p112 = scmp.ne.s32.totalorder %s97, %s111
      %p113 = scmp.eq.s32.totalorder %s24, 0
      %p114 = por %p112, %p113
      %s116 = sadd.s32 %s115, 1
      %p119 = scmp.eq.s32.totalorder %s18, 1
      %p120 = scmp.ne.s32.totalorder %s115, %s117
      %p121 = scmp.eq.s32.totalorder %s18, 0
      %p122 = por %p120, %p121
      %p123 = scmp.ne.s32.totalorder %s115, %s117
      %p124 = scmp.eq.s32.totalorder %s23, 1
      %p125 = por %p123, %p124
      %p126 = scmp.ne.s32.totalorder %s117, %s118
      %p127 = scmp.eq.s32.totalorder %s23, 0
      %p128 = por %p126, %p127
      %p129 = scmp.ne.s32.totalorder %s117, %s118
      %p130 = scmp.eq.s32.totalorder %s24, 1
      %p131 = por %p129, %p130
      %p133 = scmp.ne.s32.totalorder %s118, %s132
      %p134 = scmp.eq.s32.totalorder %s24, 0
      %p135 = por %p133, %p134
      %s137 = sadd.s32 %s136, 1
      %p140 = scmp.eq.s32.totalorder %s18, 1
      %p141 = scmp.ne.s32.totalorder %s136, %s138
      %p142 = scmp.eq.s32.totalorder %s18, 0
      %p143 = por %p141, %p142
      %p144 = scmp.ne.s32.totalorder %s136, %s138
      %p145 = scmp.eq.s32.totalorder %s23, 1
      %p146 = por %p144, %p145
      %p147 = scmp.ne.s32.totalorder %s138, %s139
      %p148 = scmp.eq.s32.totalorder %s23, 0
      %p149 = por %p147, %p148
      %p150 = scmp.ne.s32.totalorder %s138, %s139
      %p151 = scmp.eq.s32.totalorder %s24, 1
      %p152 = por %p150, %p151
      %p154 = scmp.ne.s32.totalorder %s139, %s153
      %p155 = scmp.eq.s32.totalorder %s24, 0
      %p156 = por %p154, %p155
      %s157 = ssub.s32 %s18, %s25
      %p158 = scmp.eq.s32.totalorder %s157, 0
      %s160 = sadd.s32 %s159, 1
      %s161 = scalar_select %p158, %s159, %s160
      %p164 = pneg %p158
      %p165 = scmp.eq.s32.totalorder %s18, 1
      %p166 = por %p164, %p165
      %p167 = scmp.ne.s32.totalorder %s159, %s162
      %p168 = scmp.eq.s32.totalorder %s18, 0
      %p169 = por %p167, %p168
      %p170 = scmp.ne.s32.totalorder %s159, %s162
      %p171 = scmp.eq.s32.totalorder %s23, 1
      %p172 = por %p170, %p171
      %p173 = scmp.ne.s32.totalorder %s162, %s163
      %p174 = scmp.eq.s32.totalorder %s23, 0
      %p175 = por %p173, %p174
      %p176 = scmp.ne.s32.totalorder %s162, %s163
      %p177 = scmp.eq.s32.totalorder %s24, 1
      %p178 = por %p176, %p177
      %p180 = scmp.ne.s32.totalorder %s163, %s179
      %p181 = scmp.eq.s32.totalorder %s24, 0
      %p182 = por %p180, %p181
      %s183 = ssub.s32 %s18, %s25
      %p184 = scmp.eq.s32.totalorder %s183, 0
      %s186 = sadd.s32 %s185, 1
      %s187 = scalar_select %p184, %s185, %s186
      %p190 = pneg %p184
      %p191 = scmp.eq.s32.totalorder %s18, 1
      %p192 = por %p190, %p191
      %p193 = scmp.ne.s32.totalorder %s185, %s188
      %p194 = scmp.eq.s32.totalorder %s18, 0
      %p195 = por %p193, %p194
      %p196 = scmp.ne.s32.totalorder %s185, %s188
      %p197 = scmp.eq.s32.totalorder %s23, 1
      %p198 = por %p196, %p197
      %p199 = scmp.ne.s32.totalorder %s188, %s189
      %p200 = scmp.eq.s32.totalorder %s23, 0
      %p201 = por %p199, %p200
      %p202 = scmp.ne.s32.totalorder %s188, %s189
      %p203 = scmp.eq.s32.totalorder %s24, 1
      %p204 = por %p202, %p203
      %p206 = scmp.ne.s32.totalorder %s189, %s205
      %p207 = scmp.eq.s32.totalorder %s24, 0
      %p208 = por %p206, %p207
      %p209 = scmp.le.s32.totalorder 1, %s18
      %p210 = scmp.lt.s32.totalorder %s18, 3
      %p211 = pnand %p209, %p210
      %p212 = pneg %p211
      // Predicated region
      $region9: #{reconstruction_net_forward.1} parent=5 // pred_check
        _
      $region10: #{reconstruction_net_forward.1} parent=5 // pred_check_branch
        %214 = sbr.rel (%p211) target = $region12
      $region11: #{reconstruction_net_forward.1} parent=5 // pred_region
        %s215 = ssub.s32 %s18, 1
        // Predicated region
        $region13: #{reconstruction_net_forward.1} parent=11 // pred_check
          %p216 = pneg %p65
        $region14: #{reconstruction_net_forward.1} parent=11 // pred_check_branch
          %218 = sbr.rel (%p216) target = $region16
        $region15: #{reconstruction_net_forward.1} parent=11 // pred_region
          _
        $region16: #{reconstruction_net_forward.1} parent=11 // pred_fallthru
          _
        // Predicated region
        $region17: #{reconstruction_net_forward.1} parent=11 // pred_check
          %p219 = pneg %p86
        $region18: #{reconstruction_net_forward.1} parent=11 // pred_check_branch
          %221 = sbr.rel (%p219) target = $region20
        $region19: #{reconstruction_net_forward.1} parent=11 // pred_region
          %223 = vsyncadd [#allocation3], 0
          %s224 = sshll.u32 %s2, 4
          %s225 = int_to_ptr.hbm [resolvable:$true] %s224
          %s226 = sshll.u32 [#allocation2], 4
          %s227 = int_to_ptr.vmem [resolvable:$true] %s226
          %232 = dma.hbm_to_vmem [thread:$0]  %s225, 4096, %s227, [#allocation3], 64, 64, 4
        $region20: #{reconstruction_net_forward.1} parent=11 // pred_fallthru
          _
        // Predicated region
        $region21: #{reconstruction_net_forward.1} parent=11 // pred_check
          %p233 = pneg %p107
        $region22: #{reconstruction_net_forward.1} parent=11 // pred_check_branch
          %235 = sbr.rel (%p233) target = $region24
        $region23: #{reconstruction_net_forward.1} parent=11 // pred_region
          _
        $region24: #{reconstruction_net_forward.1} parent=11 // pred_fallthru
          _
        // Predicated region
        $region25: #{reconstruction_net_forward.1} parent=11 // pred_check
          %p236 = pneg %p128
        $region26: #{reconstruction_net_forward.1} parent=11 // pred_check_branch
          %238 = sbr.rel (%p236) target = $region28
        $region27: #{reconstruction_net_forward.1} parent=11 // pred_region
          _
        $region28: #{reconstruction_net_forward.1} parent=11 // pred_fallthru
          _
        // Predicated region
        $region29: #{reconstruction_net_forward.1} parent=11 // pred_check
          %p239 = pneg %p149
        $region30: #{reconstruction_net_forward.1} parent=11 // pred_check_branch
          %241 = sbr.rel (%p239) target = $region32
        $region31: #{reconstruction_net_forward.1} parent=11 // pred_region
          _
        $region32: #{reconstruction_net_forward.1} parent=11 // pred_fallthru
          _
      $region12: #{reconstruction_net_forward.1} parent=5 // pred_fallthru
        _
      %p242 = scmp.lt.s32.totalorder %s18, 2
      // Predicated region
      $region33: #{reconstruction_net_forward.1} parent=5 // pred_check
        %p243 = pneg %p242
      $region34: #{reconstruction_net_forward.1} parent=5 // pred_check_branch
        %245 = sbr.rel (%p243) target = $region36
      $region35: #{reconstruction_net_forward.1} parent=5 // pred_region
        // Predicated region
        $region37: #{reconstruction_net_forward.1} parent=35 // pred_check
          %p246 = pneg %p38
        $region38: #{reconstruction_net_forward.1} parent=35 // pred_check_branch
          %248 = sbr.rel (%p246) target = $region40
        $region39: #{reconstruction_net_forward.1} parent=35 // pred_region
          %p249 = scmp.lt.s32.totalorder %s18, 1
          %s250 = scalar_select %p249, %s18, 1
          %s251 = smul.addr %s250, 4
          %s252 = scalar_lea.vmem %s0, %s251
        $region40: #{reconstruction_net_forward.1} parent=35 // pred_fallthru
          _
      $region36: #{reconstruction_net_forward.1} parent=5 // pred_fallthru
        _
      %p253 = scmp.le.s32.totalorder 1, %s18
      %p254 = scmp.lt.s32.totalorder %s18, 3
      %p255 = pnand %p253, %p254
      %p256 = pneg %p255
      // Predicated region
      $region41: #{reconstruction_net_forward.1} parent=5 // pred_check
        _
      $region42: #{reconstruction_net_forward.1} parent=5 // pred_check_branch
        %258 = sbr.rel (%p255) target = $region44
      $region43: #{reconstruction_net_forward.1} parent=5 // pred_region
        %s259 = ssub.s32 %s18, 1
        // Predicated region
        $region45: #{reconstruction_net_forward.1} parent=43 // pred_check
          %p260 = pneg %p86
        $region46: #{reconstruction_net_forward.1} parent=43 // pred_check_branch
          %262 = sbr.rel (%p260) target = $region48
        $region47: #{reconstruction_net_forward.1} parent=43 // pred_region
          %264 = dma.done [#allocation3], 4096
        $region48: #{reconstruction_net_forward.1} parent=43 // pred_fallthru
          _
        %p265 = scmp.lt.s32.totalorder %s23, 1
        %s266 = scalar_select %p265, %s23, 1
        %s267 = smul.addr %s266, 4
        %s268 = scalar_lea.vmem %s0, %s267
        %p269 = pneg %p44
        %p270 = pneg %p41
        %p271 = pneg %p65
        %p272 = pneg %p62
        %p273 = pneg %p86
        %p274 = pneg %p83
        %p275 = pneg %p107
        %p276 = pneg %p104
        %p277 = pneg %p128
        %p278 = pneg %p125
        %p279 = pneg %p149
        %p280 = pneg %p146
        %p281 = pneg %p175
        %p282 = pneg %p172
        %p283 = scmp.lt.s32.totalorder %s23, 1
        %s284 = scalar_select %p283, %s23, 1
        %s285 = smul.addr %s284, 2
        %s286 = smul.addr %s285, 4
        %s287 = scalar_lea.vmem %s6, %s286
        %p288 = pneg %p201
        %p289 = pneg %p198
        %s290 = sand.u32 %s188, 1
        %s291 = scalar_lea.sflag [#allocation4], %s290
        %s292 = sand.u32 %s188, 1
        %s293 = scalar_lea.vmem [#allocation5], %s292
        %p294 = scmp.lt.s32.totalorder %s23, 1
        %s295 = scalar_select %p294, %s23, 1
        %s296 = smul.addr %s295, 4
        %s297 = scalar_lea.vmem %s0, %s296
        %p298 = scmp.lt.s32.totalorder %s23, 1
        %s299 = scalar_select %p298, %s23, 1
        %s300 = smul.addr %s299, 2
        %s301 = smul.addr %s300, 4
        %s302 = scalar_lea.vmem %s6, %s301
        %v304 = vld [vmem:[%s297] sm:$0x7]
        %v305 = vld [vmem:[#allocation2] sm:$0xf]
        %v306 = vld [vmem:[#allocation2 + $0x4] sm:$0xf]
        %v307 = vld [vmem:[#allocation2 + $0x8] sm:$0xf]
        %v308 = vld [vmem:[#allocation2 + $0xc] sm:$0xf]
        %v309 = vld [vmem:[#allocation2 + $0x10] sm:$0xf]
        %v310 = vld [vmem:[#allocation2 + $0x14] sm:$0xf]
        %v311 = vld [vmem:[#allocation2 + $0x18] sm:$0xf]
        %v312 = vld [vmem:[#allocation2 + $0x1c] sm:$0xf]
        %v313 = vld [vmem:[#allocation2 + $0x20] sm:$0xf]
        %v314 = vld [vmem:[#allocation2 + $0x24] sm:$0xf]
        %v315 = vld [vmem:[#allocation2 + $0x28] sm:$0xf]
        %v316 = vld [vmem:[#allocation2 + $0x2c] sm:$0xf]
        %v317 = vld [vmem:[#allocation2 + $0x30] sm:$0xf]
        %v318 = vld [vmem:[#allocation2 + $0x34] sm:$0xf]
        %v319 = vld [vmem:[#allocation2 + $0x38] sm:$0xf]
        %v320 = vld [vmem:[#allocation2 + $0x3c] sm:$0xf]
        %v321 = vld [vmem:[#allocation2 + $0x40] sm:$0xf]
        %v322 = vld [vmem:[#allocation2 + $0x44] sm:$0xf]
        %v323 = vld [vmem:[#allocation2 + $0x48] sm:$0xf]
        %v324 = vld [vmem:[#allocation2 + $0x4c] sm:$0xf]
        %v325 = vld [vmem:[#allocation2 + $0x50] sm:$0xf]
        %v326 = vld [vmem:[#allocation2 + $0x54] sm:$0xf]
        %v327 = vld [vmem:[#allocation2 + $0x58] sm:$0xf]
        %v328 = vld [vmem:[#allocation2 + $0x5c] sm:$0xf]
        %v329 = vld [vmem:[#allocation2 + $0x60] sm:$0xf]
        %v330 = vld [vmem:[#allocation2 + $0x64] sm:$0xf]
        %v331 = vld [vmem:[#allocation2 + $0x68] sm:$0xf]
        %v332 = vld [vmem:[#allocation2 + $0x6c] sm:$0xf]
        %v333 = vld [vmem:[#allocation2 + $0x70] sm:$0xf]
        %v334 = vld [vmem:[#allocation2 + $0x74] sm:$0xf]
        %v335 = vld [vmem:[#allocation2 + $0x78] sm:$0xf]
        %v336 = vld [vmem:[#allocation2 + $0x7c] sm:$0xf]
        %v337 = vld [vmem:[#allocation2 + $0x80] sm:$0xf]
        %v338 = vld [vmem:[#allocation2 + $0x84] sm:$0xf]
        %v339 = vld [vmem:[#allocation2 + $0x88] sm:$0xf]
        %v340 = vld [vmem:[#allocation2 + $0x8c] sm:$0xf]
        %v341 = vld [vmem:[#allocation2 + $0x90] sm:$0xf]
        %v342 = vld [vmem:[#allocation2 + $0x94] sm:$0xf]
        %v343 = vld [vmem:[#allocation2 + $0x98] sm:$0xf]
        %v344 = vld [vmem:[#allocation2 + $0x9c] sm:$0xf]
        %v345 = vld [vmem:[#allocation2 + $0xa0] sm:$0xf]
        %v346 = vld [vmem:[#allocation2 + $0xa4] sm:$0xf]
        %v347 = vld [vmem:[#allocation2 + $0xa8] sm:$0xf]
        %v348 = vld [vmem:[#allocation2 + $0xac] sm:$0xf]
        %v349 = vld [vmem:[#allocation2 + $0xb0] sm:$0xf]
        %v350 = vld [vmem:[#allocation2 + $0xb4] sm:$0xf]
        %v351 = vld [vmem:[#allocation2 + $0xb8] sm:$0xf]
        %v352 = vld [vmem:[#allocation2 + $0xbc] sm:$0xf]
        %v353 = vld [vmem:[#allocation2 + $0xc0] sm:$0xf]
        %v354 = vld [vmem:[#allocation2 + $0xc4] sm:$0xf]
        %v355 = vld [vmem:[#allocation2 + $0xc8] sm:$0xf]
        %v356 = vld [vmem:[#allocation2 + $0xcc] sm:$0xf]
        %v357 = vld [vmem:[#allocation2 + $0xd0] sm:$0xf]
        %v358 = vld [vmem:[#allocation2 + $0xd4] sm:$0xf]
        %v359 = vld [vmem:[#allocation2 + $0xd8] sm:$0xf]
        %v360 = vld [vmem:[#allocation2 + $0xdc] sm:$0xf]
        %v361 = vld [vmem:[#allocation2 + $0xe0] sm:$0xf]
        %v362 = vld [vmem:[#allocation2 + $0xe4] sm:$0xf]
        %v363 = vld [vmem:[#allocation2 + $0xe8] sm:$0xf]
        %v364 = vld [vmem:[#allocation2 + $0xec] sm:$0xf]
        %v365 = vld [vmem:[#allocation2 + $0xf0] sm:$0xf]
        %v366 = vld [vmem:[#allocation2 + $0xf4] sm:$0xf]
        %v367 = vld [vmem:[#allocation2 + $0xf8] sm:$0xf]
        %v368 = vld [vmem:[#allocation2 + $0xfc] sm:$0xf]
        %v369 = vld [vmem:[%s3] sm:$0xf]
        %v370 = vld [vmem:[%s3 + $0x4] sm:$0xf]
        %v371 = vld [vmem:[%s3 + $0x8] sm:$0xf]
        %v372 = vld [vmem:[%s3 + $0xc] sm:$0xf]
        %v373 = vld [vmem:[%s3 + $0x10] sm:$0xf]
        %v374 = vld [vmem:[%s3 + $0x14] sm:$0xf]
        %v375 = vld [vmem:[%s3 + $0x18] sm:$0xf]
        %v376 = vld [vmem:[%s3 + $0x1c] sm:$0xf]
        %v377 = vld [vmem:[%s3 + $0x20] sm:$0xf]
        %v378 = vld [vmem:[%s3 + $0x24] sm:$0xf]
        %v379 = vld [vmem:[%s3 + $0x28] sm:$0xf]
        %v380 = vld [vmem:[%s3 + $0x2c] sm:$0xf]
        %v381 = vld [vmem:[%s3 + $0x30] sm:$0xf]
        %v382 = vld [vmem:[%s3 + $0x34] sm:$0xf]
        %v383 = vld [vmem:[%s3 + $0x38] sm:$0xf]
        %v384 = vld [vmem:[%s3 + $0x3c] sm:$0xf]
        %v385 = vld [vmem:[%s3 + $0x40] sm:$0xf]
        %v386 = vld [vmem:[%s3 + $0x48] sm:$0xf]
        %v387 = vld [vmem:[%s4] sm:$0xff]
        %v388 = vld [vmem:[%s4 + $0x8] sm:$0xff]
        %v389 = vld [vmem:[%s4 + $0x10] sm:$0xff]
        %v390 = vld [vmem:[%s4 + $0x18] sm:$0xff]
        %v391 = vld [vmem:[%s4 + $0x20] sm:$0xff]
        %v392 = vld [vmem:[%s4 + $0x28] sm:$0xff]
        %v393 = vld [vmem:[%s4 + $0x30] sm:$0xff]
        %v394 = vld [vmem:[%s4 + $0x38] sm:$0xff]
        %v395 = vld [vmem:[%s4 + $0x40] sm:$0xff]
        %v396 = vld [vmem:[%s4 + $0x48] sm:$0xff]
        %v397 = vld [vmem:[%s4 + $0x50] sm:$0xff]
        %v398 = vld [vmem:[%s4 + $0x58] sm:$0xff]
        %v399 = vld [vmem:[%s4 + $0x60] sm:$0xff]
        %v400 = vld [vmem:[%s4 + $0x68] sm:$0xff]
        %v401 = vld [vmem:[%s4 + $0x70] sm:$0xff]
        %v402 = vld [vmem:[%s4 + $0x78] sm:$0xff]
        %v403 = vld [vmem:[%s4 + $0x80] sm:$0xff]
        %v404 = vld [vmem:[%s4 + $0x88] sm:$0xff]
        %v405 = vld [vmem:[%s4 + $0x90] sm:$0xff]
        %v406 = vld [vmem:[%s4 + $0x98] sm:$0xff]
        %v407 = vld [vmem:[%s4 + $0xa0] sm:$0xff]
        %v408 = vld [vmem:[%s4 + $0xa8] sm:$0xff]
        %v409 = vld [vmem:[%s4 + $0xb0] sm:$0xff]
        %v410 = vld [vmem:[%s4 + $0xb8] sm:$0xff]
        %v411 = vld [vmem:[%s5] sm:$0xff]
        %v412 = vld [vmem:[%s5 + $0x8] sm:$0xff]
        %v413 = vld [vmem:[%s5 + $0x10] sm:$0xff]
        %v414 = vld [vmem:[%s5 + $0x18] sm:$0xff]
        %v415 = vld [vmem:[%s5 + $0x20] sm:$0xff]
        %v416 = vld [vmem:[%s5 + $0x28] sm:$0xff]
        %v417 = vld [vmem:[%s5 + $0x30] sm:$0xff]
        %v418 = vld [vmem:[%s5 + $0x38] sm:$0xff]
        %v419 = vld [vmem:[%s5 + $0x40] sm:$0xff]
        %v420 = vld [vmem:[%s5 + $0x48] sm:$0xff]
        %v421 = vld [vmem:[%s5 + $0x50] sm:$0xff]
        %v422 = vld [vmem:[%s5 + $0x58] sm:$0xff]
        %v423 = vld [vmem:[%s5 + $0x60] sm:$0xff]
        %v424 = vld [vmem:[%s5 + $0x68] sm:$0xff]
        %v425 = vld [vmem:[%s5 + $0x70] sm:$0xff]
        %v426 = vld [vmem:[%s5 + $0x78] sm:$0xff]
        %428 = vset.pattern.permute.xlu0 0
        %429 = vperm.xlu0 %428, %v387
        %v430 = vpop.permute.xlu0 %429
        %433 = vset.pattern.permute.xlu0 0
        %434 = vperm.xlu0 %433, %v388
        %v435 = vpop.permute.xlu0 %434
        %438 = vset.pattern.permute.xlu0 0
        %439 = vperm.xlu0 %438, %v389
        %v440 = vpop.permute.xlu0 %439
        %443 = vset.pattern.permute.xlu0 0
        %444 = vperm.xlu0 %443, %v390
        %v445 = vpop.permute.xlu0 %444
        %448 = vset.pattern.permute.xlu0 0
        %449 = vperm.xlu0 %448, %v391
        %v450 = vpop.permute.xlu0 %449
        %453 = vset.pattern.permute.xlu0 0
        %454 = vperm.xlu0 %453, %v392
        %v455 = vpop.permute.xlu0 %454
        %458 = vset.pattern.permute.xlu0 0
        %459 = vperm.xlu0 %458, %v393
        %v460 = vpop.permute.xlu0 %459
        %463 = vset.pattern.permute.xlu0 0
        %464 = vperm.xlu0 %463, %v394
        %v465 = vpop.permute.xlu0 %464
        %v467 = vperm.slane %v304, 0
        %v468 = vmul.f32 %v430, %v467
        %v469 = vmul.f32 %v435, %v467
        %v470 = vmul.f32 %v440, %v467
        %v471 = vmul.f32 %v445, %v467
        %v472 = vmul.f32 %v450, %v467
        %v473 = vmul.f32 %v455, %v467
        %v474 = vmul.f32 %v460, %v467
        %v475 = vmul.f32 %v465, %v467
        %476 = vset.pattern.permute.xlu0 1
        %477 = vperm.xlu0 %476, %v387
        %v478 = vpop.permute.xlu0 %477
        %480 = vset.pattern.permute.xlu0 1
        %481 = vperm.xlu0 %480, %v388
        %v482 = vpop.permute.xlu0 %481
        %484 = vset.pattern.permute.xlu0 1
        %485 = vperm.xlu0 %484, %v389
        %v486 = vpop.permute.xlu0 %485
        %488 = vset.pattern.permute.xlu0 1
        %489 = vperm.xlu0 %488, %v390
        %v490 = vpop.permute.xlu0 %489
        %492 = vset.pattern.permute.xlu0 1
        %493 = vperm.xlu0 %492, %v391
        %v494 = vpop.permute.xlu0 %493
        %496 = vset.pattern.permute.xlu0 1
        %497 = vperm.xlu0 %496, %v392
        %v498 = vpop.permute.xlu0 %497
        %500 = vset.pattern.permute.xlu0 1
        %501 = vperm.xlu0 %500, %v393
        %v502 = vpop.permute.xlu0 %501
        %504 = vset.pattern.permute.xlu0 1
        %505 = vperm.xlu0 %504, %v394
        %v506 = vpop.permute.xlu0 %505
        %v508 = vperm.slane %v304, 1
        %v509 = vmul.f32 %v478, %v508
        %v510 = vmul.f32 %v482, %v508
        %v511 = vmul.f32 %v486, %v508
        %v512 = vmul.f32 %v490, %v508
        %v513 = vmul.f32 %v494, %v508
        %v514 = vmul.f32 %v498, %v508
        %v515 = vmul.f32 %v502, %v508
        %v516 = vmul.f32 %v506, %v508
        %v517 = vadd.f32 %v468, %v509
        %v518 = vadd.f32 %v469, %v510
        %v519 = vadd.f32 %v470, %v511
        %v520 = vadd.f32 %v471, %v512
        %v521 = vadd.f32 %v472, %v513
        %v522 = vadd.f32 %v473, %v514
        %v523 = vadd.f32 %v474, %v515
        %v524 = vadd.f32 %v475, %v516
        %525 = vset.pattern.permute.xlu0 2
        %526 = vperm.xlu0 %525, %v387
        %v527 = vpop.permute.xlu0 %526
        %529 = vset.pattern.permute.xlu0 2
        %530 = vperm.xlu0 %529, %v388
        %v531 = vpop.permute.xlu0 %530
        %533 = vset.pattern.permute.xlu0 2
        %534 = vperm.xlu0 %533, %v389
        %v535 = vpop.permute.xlu0 %534
        %537 = vset.pattern.permute.xlu0 2
        %538 = vperm.xlu0 %537, %v390
        %v539 = vpop.permute.xlu0 %538
        %541 = vset.pattern.permute.xlu0 2
        %542 = vperm.xlu0 %541, %v391
        %v543 = vpop.permute.xlu0 %542
        %545 = vset.pattern.permute.xlu0 2
        %546 = vperm.xlu0 %545, %v392
        %v547 = vpop.permute.xlu0 %546
        %549 = vset.pattern.permute.xlu0 2
        %550 = vperm.xlu0 %549, %v393
        %v551 = vpop.permute.xlu0 %550
        %553 = vset.pattern.permute.xlu0 2
        %554 = vperm.xlu0 %553, %v394
        %v555 = vpop.permute.xlu0 %554
        %v557 = vperm.slane %v304, 2
        %v558 = vmul.f32 %v527, %v557
        %v559 = vmul.f32 %v531, %v557
        %v560 = vmul.f32 %v535, %v557
        %v561 = vmul.f32 %v539, %v557
        %v562 = vmul.f32 %v543, %v557
        %v563 = vmul.f32 %v547, %v557
        %v564 = vmul.f32 %v551, %v557
        %v565 = vmul.f32 %v555, %v557
        %v566 = vadd.f32 %v517, %v558
        %v567 = vadd.f32 %v518, %v559
        %v568 = vadd.f32 %v519, %v560
        %v569 = vadd.f32 %v520, %v561
        %v570 = vadd.f32 %v521, %v562
        %v571 = vadd.f32 %v522, %v563
        %v572 = vadd.f32 %v523, %v564
        %v573 = vadd.f32 %v524, %v565
        %575 = vset.pattern.permute.xlu0 0
        %576 = vperm.xlu0 %575, %v411
        %v577 = vpop.permute.xlu0 %576
        %580 = vset.pattern.permute.xlu0 0
        %581 = vperm.xlu0 %580, %v412
        %v582 = vpop.permute.xlu0 %581
        %585 = vset.pattern.permute.xlu0 0
        %586 = vperm.xlu0 %585, %v413
        %v587 = vpop.permute.xlu0 %586
        %590 = vset.pattern.permute.xlu0 0
        %591 = vperm.xlu0 %590, %v414
        %v592 = vpop.permute.xlu0 %591
        %595 = vset.pattern.permute.xlu0 0
        %596 = vperm.xlu0 %595, %v415
        %v597 = vpop.permute.xlu0 %596
        %600 = vset.pattern.permute.xlu0 0
        %601 = vperm.xlu0 %600, %v416
        %v602 = vpop.permute.xlu0 %601
        %605 = vset.pattern.permute.xlu0 0
        %606 = vperm.xlu0 %605, %v417
        %v607 = vpop.permute.xlu0 %606
        %610 = vset.pattern.permute.xlu0 0
        %611 = vperm.xlu0 %610, %v418
        %v612 = vpop.permute.xlu0 %611
        %v614 = vadd.f32 %v566, %v577
        %v615 = vadd.f32 %v567, %v582
        %v616 = vadd.f32 %v568, %v587
        %v617 = vadd.f32 %v569, %v592
        %v618 = vadd.f32 %v570, %v597
        %v619 = vadd.f32 %v571, %v602
        %v620 = vadd.f32 %v572, %v607
        %v621 = vadd.f32 %v573, %v612
        %v622 = vmax.f32 %v614, 0.0
        %v623 = vmax.f32 %v615, 0.0
        %v624 = vmax.f32 %v616, 0.0
        %v625 = vmax.f32 %v617, 0.0
        %v626 = vmax.f32 %v618, 0.0
        %v627 = vmax.f32 %v619, 0.0
        %v628 = vmax.f32 %v620, 0.0
        %v629 = vmax.f32 %v621, 0.0
        %v630 = vpack.c.bf16 %v623, %v622
        %v631 = vpack.c.bf16 %v625, %v624
        %v632 = vpack.c.bf16 %v627, %v626
        %v633 = vpack.c.bf16 %v629, %v628
        %634 = vset.pattern.permute.xlu0 1
        %635 = vperm.xlu0 %634, %v411
        %v636 = vpop.permute.xlu0 %635
        %638 = vset.pattern.permute.xlu0 1
        %639 = vperm.xlu0 %638, %v412
        %v640 = vpop.permute.xlu0 %639
        %642 = vset.pattern.permute.xlu0 1
        %643 = vperm.xlu0 %642, %v413
        %v644 = vpop.permute.xlu0 %643
        %646 = vset.pattern.permute.xlu0 1
        %647 = vperm.xlu0 %646, %v414
        %v648 = vpop.permute.xlu0 %647
        %650 = vset.pattern.permute.xlu0 1
        %651 = vperm.xlu0 %650, %v415
        %v652 = vpop.permute.xlu0 %651
        %654 = vset.pattern.permute.xlu0 1
        %655 = vperm.xlu0 %654, %v416
        %v656 = vpop.permute.xlu0 %655
        %658 = vset.pattern.permute.xlu0 1
        %659 = vperm.xlu0 %658, %v417
        %v660 = vpop.permute.xlu0 %659
        %662 = vset.pattern.permute.xlu0 1
        %663 = vperm.xlu0 %662, %v418
        %v664 = vpop.permute.xlu0 %663
        %667 = vset.pattern.permute.xlu0 1
        %668 = vperm.xlu0 %667, %v419
        %v669 = vpop.permute.xlu0 %668
        %672 = vset.pattern.permute.xlu0 1
        %673 = vperm.xlu0 %672, %v420
        %v674 = vpop.permute.xlu0 %673
        %677 = vset.pattern.permute.xlu0 1
        %678 = vperm.xlu0 %677, %v421
        %v679 = vpop.permute.xlu0 %678
        %682 = vset.pattern.permute.xlu0 1
        %683 = vperm.xlu0 %682, %v422
        %v684 = vpop.permute.xlu0 %683
        %687 = vset.pattern.permute.xlu0 1
        %688 = vperm.xlu0 %687, %v423
        %v689 = vpop.permute.xlu0 %688
        %692 = vset.pattern.permute.xlu0 1
        %693 = vperm.xlu0 %692, %v424
        %v694 = vpop.permute.xlu0 %693
        %697 = vset.pattern.permute.xlu0 1
        %698 = vperm.xlu0 %697, %v425
        %v699 = vpop.permute.xlu0 %698
        %702 = vset.pattern.permute.xlu0 1
        %703 = vperm.xlu0 %702, %v426
        %v704 = vpop.permute.xlu0 %703
        %v722 = vunpack.c.l.b16 %v369
        %v723 = vunpack.c.l.b16 %v370
        %v724 = vunpack.c.l.b16 %v371
        %v725 = vunpack.c.l.b16 %v372
        %v726 = vunpack.c.l.b16 %v373
        %v727 = vunpack.c.l.b16 %v374
        %v728 = vunpack.c.l.b16 %v375
        %v729 = vunpack.c.l.b16 %v376
        %v730 = vunpack.c.l.b16 %v377
        %v731 = vunpack.c.l.b16 %v378
        %v732 = vunpack.c.l.b16 %v379
        %v733 = vunpack.c.l.b16 %v380
        %v734 = vunpack.c.l.b16 %v381
        %v735 = vunpack.c.l.b16 %v382
        %v736 = vunpack.c.l.b16 %v383
        %v737 = vunpack.c.l.b16 %v384
        %v738 = vpack.c.b16 %v723, %v722
        %v739 = vpack.c.b16 %v725, %v724
        %v740 = vpack.c.b16 %v727, %v726
        %v741 = vpack.c.b16 %v729, %v728
        %v742 = vpack.c.b16 %v731, %v730
        %v743 = vpack.c.b16 %v733, %v732
        %v744 = vpack.c.b16 %v735, %v734
        %v745 = vpack.c.b16 %v737, %v736
        %vm746 = vcmask 523264
        %v748 = vsel %vm746, %v738, 0
        %v751 = vsel %vm746, %v739, 0
        %v754 = vsel %vm746, %v740, 0
        %v757 = vsel %vm746, %v741, 0
        %v760 = vsel %vm746, %v742, 0
        %v763 = vsel %vm746, %v743, 0
        %v766 = vsel %vm746, %v744, 0
        %v769 = vsel %vm746, %v745, 0
        %771 = vmatpush.bf16.msra.mxu0 0
        %772 = vmatpush.bf16.msra.mxu0 0
        %773 = vmatpush.bf16.msra.mxu0 0
        %774 = vmatpush.bf16.msra.mxu0 0
        %775 = vmatpush.bf16.msra.mxu0 %v633
        %776 = vmatpush.bf16.msra.mxu0 %v632
        %777 = vmatpush.bf16.msra.mxu0 %v631
        %778 = vmatpush.bf16.msra.mxu0 %v630
        %779 = vmatmul.bf16.gmra.mxu0 %v748
        %v780 = vpop.f32.mrf.mxu0
        %v781 = vadd.f32 %v636, %v780
        %v782 = vpop.f32.mrf.mxu0
        %v783 = vadd.f32 %v640, %v782
        %784 = vmatmul.bf16.gmra.mxu0 %v751
        %v785 = vpop.f32.mrf.mxu0
        %v786 = vadd.f32 %v644, %v785
        %v787 = vpop.f32.mrf.mxu0
        %v788 = vadd.f32 %v648, %v787
        %789 = vmatmul.bf16.gmra.mxu0 %v754
        %v790 = vpop.f32.mrf.mxu0
        %v791 = vadd.f32 %v652, %v790
        %v792 = vpop.f32.mrf.mxu0
        %v793 = vadd.f32 %v656, %v792
        %794 = vmatmul.bf16.gmra.mxu0 %v757
        %v795 = vpop.f32.mrf.mxu0
        %v796 = vadd.f32 %v660, %v795
        %v797 = vpop.f32.mrf.mxu0
        %v798 = vadd.f32 %v664, %v797
        %799 = vmatmul.bf16.gmra.mxu0 %v760
        %v800 = vpop.f32.mrf.mxu0
        %v801 = vadd.f32 %v669, %v800
        %v802 = vpop.f32.mrf.mxu0
        %v803 = vadd.f32 %v674, %v802
        %804 = vmatmul.bf16.gmra.mxu0 %v763
        %v805 = vpop.f32.mrf.mxu0
        %v806 = vadd.f32 %v679, %v805
        %v807 = vpop.f32.mrf.mxu0
        %v808 = vadd.f32 %v684, %v807
        %809 = vmatmul.bf16.gmra.mxu0 %v766
        %v810 = vpop.f32.mrf.mxu0
        %v811 = vadd.f32 %v689, %v810
        %v812 = vpop.f32.mrf.mxu0
        %v813 = vadd.f32 %v694, %v812
        %814 = vmatmul.bf16.gmra.mxu0 %v769
        %v815 = vpop.f32.mrf.mxu0
        %v816 = vadd.f32 %v699, %v815
        %v817 = vpop.f32.mrf.mxu0
        %v818 = vadd.f32 %v704, %v817
        %819 = vdwg.mxu0
        %v820 = vmax.f32 %v781, 0.0
        %v821 = vmax.f32 %v783, 0.0
        %v822 = vmax.f32 %v786, 0.0
        %v823 = vmax.f32 %v788, 0.0
        %v824 = vmax.f32 %v791, 0.0
        %v825 = vmax.f32 %v793, 0.0
        %v826 = vmax.f32 %v796, 0.0
        %v827 = vmax.f32 %v798, 0.0
        %v828 = vmax.f32 %v801, 0.0
        %v829 = vmax.f32 %v803, 0.0
        %v830 = vmax.f32 %v806, 0.0
        %v831 = vmax.f32 %v808, 0.0
        %v832 = vmax.f32 %v811, 0.0
        %v833 = vmax.f32 %v813, 0.0
        %v834 = vmax.f32 %v816, 0.0
        %v835 = vmax.f32 %v818, 0.0
        %v836 = vpack.c.bf16 %v821, %v820
        %v837 = vpack.c.bf16 %v823, %v822
        %v838 = vpack.c.bf16 %v825, %v824
        %v839 = vpack.c.bf16 %v827, %v826
        %v840 = vpack.c.bf16 %v829, %v828
        %v841 = vpack.c.bf16 %v831, %v830
        %v842 = vpack.c.bf16 %v833, %v832
        %v843 = vpack.c.bf16 %v835, %v834
        %844 = vset.pattern.permute.xlu0 2
        %845 = vperm.xlu0 %844, %v411
        %v846 = vpop.permute.xlu0 %845
        %848 = vset.pattern.permute.xlu0 2
        %849 = vperm.xlu0 %848, %v412
        %v850 = vpop.permute.xlu0 %849
        %852 = vset.pattern.permute.xlu0 2
        %853 = vperm.xlu0 %852, %v413
        %v854 = vpop.permute.xlu0 %853
        %856 = vset.pattern.permute.xlu0 2
        %857 = vperm.xlu0 %856, %v414
        %v858 = vpop.permute.xlu0 %857
        %860 = vset.pattern.permute.xlu0 2
        %861 = vperm.xlu0 %860, %v415
        %v862 = vpop.permute.xlu0 %861
        %864 = vset.pattern.permute.xlu0 2
        %865 = vperm.xlu0 %864, %v416
        %v866 = vpop.permute.xlu0 %865
        %868 = vset.pattern.permute.xlu0 2
        %869 = vperm.xlu0 %868, %v417
        %v870 = vpop.permute.xlu0 %869
        %872 = vset.pattern.permute.xlu0 2
        %873 = vperm.xlu0 %872, %v418
        %v874 = vpop.permute.xlu0 %873
        %876 = vset.pattern.permute.xlu0 2
        %877 = vperm.xlu0 %876, %v419
        %v878 = vpop.permute.xlu0 %877
        %880 = vset.pattern.permute.xlu0 2
        %881 = vperm.xlu0 %880, %v420
        %v882 = vpop.permute.xlu0 %881
        %884 = vset.pattern.permute.xlu0 2
        %885 = vperm.xlu0 %884, %v421
        %v886 = vpop.permute.xlu0 %885
        %888 = vset.pattern.permute.xlu0 2
        %889 = vperm.xlu0 %888, %v422
        %v890 = vpop.permute.xlu0 %889
        %892 = vset.pattern.permute.xlu0 2
        %893 = vperm.xlu0 %892, %v423
        %v894 = vpop.permute.xlu0 %893
        %896 = vset.pattern.permute.xlu0 2
        %897 = vperm.xlu0 %896, %v424
        %v898 = vpop.permute.xlu0 %897
        %900 = vset.pattern.permute.xlu0 2
        %901 = vperm.xlu0 %900, %v425
        %v902 = vpop.permute.xlu0 %901
        %904 = vset.pattern.permute.xlu0 2
        %905 = vperm.xlu0 %904, %v426
        %v906 = vpop.permute.xlu0 %905
        %v924 = vunpack.c.l.b16 %v305
        %v925 = vunpack.c.l.b16 %v306
        %v926 = vunpack.c.l.b16 %v307
        %v927 = vunpack.c.l.b16 %v308
        %v928 = vunpack.c.l.b16 %v309
        %v929 = vunpack.c.l.b16 %v310
        %v930 = vunpack.c.l.b16 %v311
        %v931 = vunpack.c.l.b16 %v312
        %v932 = vunpack.c.l.b16 %v313
        %v933 = vunpack.c.l.b16 %v314
        %v934 = vunpack.c.l.b16 %v315
        %v935 = vunpack.c.l.b16 %v316
        %v936 = vunpack.c.l.b16 %v317
        %v937 = vunpack.c.l.b16 %v318
        %v938 = vunpack.c.l.b16 %v319
        %v939 = vunpack.c.l.b16 %v320
        %v940 = vpack.c.b16 %v925, %v924
        %v941 = vpack.c.b16 %v927, %v926
        %v942 = vpack.c.b16 %v929, %v928
        %v943 = vpack.c.b16 %v931, %v930
        %v944 = vpack.c.b16 %v933, %v932
        %v945 = vpack.c.b16 %v935, %v934
        %v946 = vpack.c.b16 %v937, %v936
        %v947 = vpack.c.b16 %v939, %v938
        %956 = vmatpush.bf16.msra.mxu0 %v843
        %957 = vmatpush.bf16.msra.mxu0 %v842
        %958 = vmatpush.bf16.msra.mxu0 %v841
        %959 = vmatpush.bf16.msra.mxu0 %v840
        %960 = vmatpush.bf16.msra.mxu0 %v839
        %961 = vmatpush.bf16.msra.mxu0 %v838
        %962 = vmatpush.bf16.msra.mxu0 %v837
        %963 = vmatpush.bf16.msra.mxu0 %v836
        %964 = vmatmul.bf16.gmra.mxu0 %v940
        %v965 = vpop.f32.mrf.mxu0
        %v966 = vadd.f32 %v846, %v965
        %v967 = vpop.f32.mrf.mxu0
        %v968 = vadd.f32 %v850, %v967
        %969 = vmatmul.bf16.gmra.mxu0 %v941
        %v970 = vpop.f32.mrf.mxu0
        %v971 = vadd.f32 %v854, %v970
        %v972 = vpop.f32.mrf.mxu0
        %v973 = vadd.f32 %v858, %v972
        %974 = vmatmul.bf16.gmra.mxu0 %v942
        %v975 = vpop.f32.mrf.mxu0
        %v976 = vadd.f32 %v862, %v975
        %v977 = vpop.f32.mrf.mxu0
        %v978 = vadd.f32 %v866, %v977
        %979 = vmatmul.bf16.gmra.mxu0 %v943
        %v980 = vpop.f32.mrf.mxu0
        %v981 = vadd.f32 %v870, %v980
        %v982 = vpop.f32.mrf.mxu0
        %v983 = vadd.f32 %v874, %v982
        %984 = vmatmul.bf16.gmra.mxu0 %v944
        %v985 = vpop.f32.mrf.mxu0
        %v986 = vadd.f32 %v878, %v985
        %v987 = vpop.f32.mrf.mxu0
        %v988 = vadd.f32 %v882, %v987
        %989 = vmatmul.bf16.gmra.mxu0 %v945
        %v990 = vpop.f32.mrf.mxu0
        %v991 = vadd.f32 %v886, %v990
        %v992 = vpop.f32.mrf.mxu0
        %v993 = vadd.f32 %v890, %v992
        %994 = vmatmul.bf16.gmra.mxu0 %v946
        %v995 = vpop.f32.mrf.mxu0
        %v996 = vadd.f32 %v894, %v995
        %v997 = vpop.f32.mrf.mxu0
        %v998 = vadd.f32 %v898, %v997
        %999 = vmatmul.bf16.gmra.mxu0 %v947
        %v1000 = vpop.f32.mrf.mxu0
        %v1001 = vadd.f32 %v902, %v1000
        %v1002 = vpop.f32.mrf.mxu0
        %v1003 = vadd.f32 %v906, %v1002
        %1004 = vdwg.mxu0
        %1005 = vmax.xlane.f32.xlu0 %v966
        %v1006 = vpop.xlane.xlu0 %1005
        %1007 = vmax.xlane.f32.xlu0 %v968
        %v1008 = vpop.xlane.xlu0 %1007
        %1009 = vmax.xlane.f32.xlu0 %v971
        %v1010 = vpop.xlane.xlu0 %1009
        %1011 = vmax.xlane.f32.xlu0 %v973
        %v1012 = vpop.xlane.xlu0 %1011
        %1013 = vmax.xlane.f32.xlu0 %v976
        %v1014 = vpop.xlane.xlu0 %1013
        %1015 = vmax.xlane.f32.xlu0 %v978
        %v1016 = vpop.xlane.xlu0 %1015
        %1017 = vmax.xlane.f32.xlu0 %v981
        %v1018 = vpop.xlane.xlu0 %1017
        %1019 = vmax.xlane.f32.xlu0 %v983
        %v1020 = vpop.xlane.xlu0 %1019
        %1021 = vmax.xlane.f32.xlu0 %v986
        %v1022 = vpop.xlane.xlu0 %1021
        %1023 = vmax.xlane.f32.xlu0 %v988
        %v1024 = vpop.xlane.xlu0 %1023
        %1025 = vmax.xlane.f32.xlu0 %v991
        %v1026 = vpop.xlane.xlu0 %1025
        %1027 = vmax.xlane.f32.xlu0 %v993
        %v1028 = vpop.xlane.xlu0 %1027
        %1029 = vmax.xlane.f32.xlu0 %v996
        %v1030 = vpop.xlane.xlu0 %1029
        %1031 = vmax.xlane.f32.xlu0 %v998
        %v1032 = vpop.xlane.xlu0 %1031
        %1033 = vmax.xlane.f32.xlu0 %v1001
        %v1034 = vpop.xlane.xlu0 %1033
        %1035 = vmax.xlane.f32.xlu0 %v1003
        %v1036 = vpop.xlane.xlu0 %1035
        %1037 = vxpose.xlu0.b32.start [1/16] %v1006, 128
        %1038 = vxpose.xlu0.b32.cont [2/16] %v1008, 128
        %1039 = vxpose.xlu0.b32.cont [3/16] %v1010, 128
        %1040 = vxpose.xlu0.b32.cont [4/16] %v1012, 128
        %1041 = vxpose.xlu0.b32.cont [5/16] %v1014, 128
        %1042 = vxpose.xlu0.b32.cont [6/16] %v1016, 128
        %1043 = vxpose.xlu0.b32.cont [7/16] %v1018, 128
        %1044 = vxpose.xlu0.b32.cont [8/16] %v1020, 128
        %1045 = vxpose.xlu0.b32.cont [9/16] %v1022, 128
        %1046 = vxpose.xlu0.b32.cont [10/16] %v1024, 128
        %1047 = vxpose.xlu0.b32.cont [11/16] %v1026, 128
        %1048 = vxpose.xlu0.b32.cont [12/16] %v1028, 128
        %1049 = vxpose.xlu0.b32.cont [13/16] %v1030, 128
        %1050 = vxpose.xlu0.b32.cont [14/16] %v1032, 128
        %1051 = vxpose.xlu0.b32.cont [15/16] %v1034, 128
        %1052 = vxpose.xlu0.b32.end [16/16] %v1036, 128
        %v1053 = vpop.trf.xlu0
        %v1054 = vpop.trf.xlu0
        %v1055 = vpop.trf.xlu0
        %v1056 = vpop.trf.xlu0
        %v1057 = vpop.trf.xlu0
        %v1058 = vpop.trf.xlu0
        %v1059 = vpop.trf.xlu0
        %v1060 = vpop.trf.xlu0
        %v1061 = vpop.trf.xlu0
        %v1062 = vpop.trf.xlu0
        %v1063 = vpop.trf.xlu0
        %v1064 = vpop.trf.xlu0
        %v1065 = vpop.trf.xlu0
        %v1066 = vpop.trf.xlu0
        %v1067 = vpop.trf.xlu0
        %v1068 = vpop.trf.xlu0
        %1069 = vst [vmem:[%s293] sm:$0x1] %v1053
        %v1070 = vpack.c.bf16 %v1008, %v1006
        %v1071 = vpack.c.bf16 %v1012, %v1010
        %v1072 = vpack.c.bf16 %v1016, %v1014
        %v1073 = vpack.c.bf16 %v1020, %v1018
        %v1074 = vpack.c.bf16 %v1024, %v1022
        %v1075 = vpack.c.bf16 %v1028, %v1026
        %v1076 = vpack.c.bf16 %v1032, %v1030
        %v1077 = vpack.c.bf16 %v1036, %v1034
        %v1110 = vunpack.c.l.b16 %v321
        %v1111 = vunpack.c.l.b16 %v322
        %v1112 = vunpack.c.l.b16 %v323
        %v1113 = vunpack.c.l.b16 %v324
        %v1114 = vunpack.c.l.b16 %v325
        %v1115 = vunpack.c.l.b16 %v326
        %v1116 = vunpack.c.l.b16 %v327
        %v1117 = vunpack.c.l.b16 %v328
        %v1118 = vunpack.c.l.b16 %v329
        %v1119 = vunpack.c.l.b16 %v330
        %v1120 = vunpack.c.l.b16 %v331
        %v1121 = vunpack.c.l.b16 %v332
        %v1122 = vunpack.c.l.b16 %v333
        %v1123 = vunpack.c.l.b16 %v334
        %v1124 = vunpack.c.l.b16 %v335
        %v1125 = vunpack.c.l.b16 %v336
        %v1126 = vunpack.c.l.b16 %v337
        %v1127 = vunpack.c.l.b16 %v338
        %v1128 = vunpack.c.l.b16 %v339
        %v1129 = vunpack.c.l.b16 %v340
        %v1130 = vunpack.c.l.b16 %v341
        %v1131 = vunpack.c.l.b16 %v342
        %v1132 = vunpack.c.l.b16 %v343
        %v1133 = vunpack.c.l.b16 %v344
        %v1134 = vunpack.c.l.b16 %v345
        %v1135 = vunpack.c.l.b16 %v346
        %v1136 = vunpack.c.l.b16 %v347
        %v1137 = vunpack.c.l.b16 %v348
        %v1138 = vunpack.c.l.b16 %v349
        %v1139 = vunpack.c.l.b16 %v350
        %v1140 = vunpack.c.l.b16 %v351
        %v1141 = vunpack.c.l.b16 %v352
        %v1142 = vpack.c.b16 %v1111, %v1110
        %v1143 = vpack.c.b16 %v1113, %v1112
        %v1144 = vpack.c.b16 %v1115, %v1114
        %v1145 = vpack.c.b16 %v1117, %v1116
        %v1146 = vpack.c.b16 %v1119, %v1118
        %v1147 = vpack.c.b16 %v1121, %v1120
        %v1148 = vpack.c.b16 %v1123, %v1122
        %v1149 = vpack.c.b16 %v1125, %v1124
        %v1150 = vpack.c.b16 %v1127, %v1126
        %v1151 = vpack.c.b16 %v1129, %v1128
        %v1152 = vpack.c.b16 %v1131, %v1130
        %v1153 = vpack.c.b16 %v1133, %v1132
        %v1154 = vpack.c.b16 %v1135, %v1134
        %v1155 = vpack.c.b16 %v1137, %v1136
        %v1156 = vpack.c.b16 %v1139, %v1138
        %v1157 = vpack.c.b16 %v1141, %v1140
        %1174 = vmatpush.bf16.msra.mxu0 %v1077
        %1175 = vmatpush.bf16.msra.mxu0 %v1076
        %1176 = vmatpush.bf16.msra.mxu0 %v1075
        %1177 = vmatpush.bf16.msra.mxu0 %v1074
        %1178 = vmatpush.bf16.msra.mxu0 %v1073
        %1179 = vmatpush.bf16.msra.mxu0 %v1072
        %1180 = vmatpush.bf16.msra.mxu0 %v1071
        %1181 = vmatpush.bf16.msra.mxu0 %v1070
        %1182 = vmatmul.bf16.gmra.mxu0 %v1142
        %v1183 = vpop.f32.mrf.mxu0
        %v1184 = vadd.f32 0.0, %v1183
        %v1185 = vpop.f32.mrf.mxu0
        %v1186 = vadd.f32 0.0, %v1185
        %1187 = vmatmul.bf16.gmra.mxu0 %v1143
        %v1188 = vpop.f32.mrf.mxu0
        %v1189 = vadd.f32 0.0, %v1188
        %v1190 = vpop.f32.mrf.mxu0
        %v1191 = vadd.f32 0.0, %v1190
        %1192 = vmatmul.bf16.gmra.mxu0 %v1144
        %v1193 = vpop.f32.mrf.mxu0
        %v1194 = vadd.f32 0.0, %v1193
        %v1195 = vpop.f32.mrf.mxu0
        %v1196 = vadd.f32 0.0, %v1195
        %1197 = vmatmul.bf16.gmra.mxu0 %v1145
        %v1198 = vpop.f32.mrf.mxu0
        %v1199 = vadd.f32 0.0, %v1198
        %v1200 = vpop.f32.mrf.mxu0
        %v1201 = vadd.f32 0.0, %v1200
        %1202 = vmatmul.bf16.gmra.mxu0 %v1146
        %v1203 = vpop.f32.mrf.mxu0
        %v1204 = vadd.f32 0.0, %v1203
        %v1205 = vpop.f32.mrf.mxu0
        %v1206 = vadd.f32 0.0, %v1205
        %1207 = vmatmul.bf16.gmra.mxu0 %v1147
        %v1208 = vpop.f32.mrf.mxu0
        %v1209 = vadd.f32 0.0, %v1208
        %v1210 = vpop.f32.mrf.mxu0
        %v1211 = vadd.f32 0.0, %v1210
        %1212 = vmatmul.bf16.gmra.mxu0 %v1148
        %v1213 = vpop.f32.mrf.mxu0
        %v1214 = vadd.f32 0.0, %v1213
        %v1215 = vpop.f32.mrf.mxu0
        %v1216 = vadd.f32 0.0, %v1215
        %1217 = vmatmul.bf16.gmra.mxu0 %v1149
        %v1218 = vpop.f32.mrf.mxu0
        %v1219 = vadd.f32 0.0, %v1218
        %v1220 = vpop.f32.mrf.mxu0
        %v1221 = vadd.f32 0.0, %v1220
        %1222 = vmatmul.bf16.gmra.mxu0 %v1150
        %v1223 = vpop.f32.mrf.mxu0
        %v1224 = vadd.f32 0.0, %v1223
        %v1225 = vpop.f32.mrf.mxu0
        %v1226 = vadd.f32 0.0, %v1225
        %1227 = vmatmul.bf16.gmra.mxu0 %v1151
        %v1228 = vpop.f32.mrf.mxu0
        %v1229 = vadd.f32 0.0, %v1228
        %v1230 = vpop.f32.mrf.mxu0
        %v1231 = vadd.f32 0.0, %v1230
        %1232 = vmatmul.bf16.gmra.mxu0 %v1152
        %v1233 = vpop.f32.mrf.mxu0
        %v1234 = vadd.f32 0.0, %v1233
        %v1235 = vpop.f32.mrf.mxu0
        %v1236 = vadd.f32 0.0, %v1235
        %1237 = vmatmul.bf16.gmra.mxu0 %v1153
        %v1238 = vpop.f32.mrf.mxu0
        %v1239 = vadd.f32 0.0, %v1238
        %v1240 = vpop.f32.mrf.mxu0
        %v1241 = vadd.f32 0.0, %v1240
        %1242 = vmatmul.bf16.gmra.mxu0 %v1154
        %v1243 = vpop.f32.mrf.mxu0
        %v1244 = vadd.f32 0.0, %v1243
        %v1245 = vpop.f32.mrf.mxu0
        %v1246 = vadd.f32 0.0, %v1245
        %1247 = vmatmul.bf16.gmra.mxu0 %v1155
        %v1248 = vpop.f32.mrf.mxu0
        %v1249 = vadd.f32 0.0, %v1248
        %v1250 = vpop.f32.mrf.mxu0
        %v1251 = vadd.f32 0.0, %v1250
        %1252 = vmatmul.bf16.gmra.mxu0 %v1156
        %v1253 = vpop.f32.mrf.mxu0
        %v1254 = vadd.f32 0.0, %v1253
        %v1255 = vpop.f32.mrf.mxu0
        %v1256 = vadd.f32 0.0, %v1255
        %1257 = vmatmul.bf16.gmra.mxu0 %v1157
        %v1258 = vpop.f32.mrf.mxu0
        %v1259 = vadd.f32 0.0, %v1258
        %v1260 = vpop.f32.mrf.mxu0
        %v1261 = vadd.f32 0.0, %v1260
        %1262 = vdwg.mxu0
        %v1263 = vld [vmem:[%s1] sm:$0xff]
        %v1264 = vld [vmem:[%s1 + $0x8] sm:$0xff]
        %v1265 = vld [vmem:[%s1 + $0x10] sm:$0xff]
        %v1266 = vld [vmem:[%s1 + $0x18] sm:$0xff]
        %v1267 = vld [vmem:[%s1 + $0x20] sm:$0xff]
        %v1268 = vld [vmem:[%s1 + $0x28] sm:$0xff]
        %v1269 = vld [vmem:[%s1 + $0x30] sm:$0xff]
        %v1270 = vld [vmem:[%s1 + $0x38] sm:$0xff]
        %v1271 = vld [vmem:[%s1 + $0x40] sm:$0xff]
        %v1272 = vld [vmem:[%s1 + $0x48] sm:$0xff]
        %v1273 = vld [vmem:[%s1 + $0x50] sm:$0xff]
        %v1274 = vld [vmem:[%s1 + $0x58] sm:$0xff]
        %v1275 = vld [vmem:[%s1 + $0x60] sm:$0xff]
        %v1276 = vld [vmem:[%s1 + $0x68] sm:$0xff]
        %v1277 = vld [vmem:[%s1 + $0x70] sm:$0xff]
        %v1278 = vld [vmem:[%s1 + $0x78] sm:$0xff]
        %v1279 = vld [vmem:[%s1 + $0x80] sm:$0xff]
        %v1280 = vld [vmem:[%s1 + $0x88] sm:$0xff]
        %v1281 = vld [vmem:[%s1 + $0x90] sm:$0xff]
        %v1282 = vld [vmem:[%s1 + $0x98] sm:$0xff]
        %v1283 = vld [vmem:[%s1 + $0xa0] sm:$0xff]
        %v1284 = vld [vmem:[%s1 + $0xa8] sm:$0xff]
        %v1285 = vld [vmem:[%s1 + $0xb0] sm:$0xff]
        %v1286 = vld [vmem:[%s1 + $0xb8] sm:$0xff]
        %v1287 = vld [vmem:[%s1 + $0xc0] sm:$0xff]
        %v1288 = vld [vmem:[%s1 + $0xc8] sm:$0xff]
        %v1289 = vld [vmem:[%s1 + $0xd0] sm:$0xff]
        %v1290 = vld [vmem:[%s1 + $0xd8] sm:$0xff]
        %v1291 = vld [vmem:[%s1 + $0xe0] sm:$0xff]
        %v1292 = vld [vmem:[%s1 + $0xe8] sm:$0xff]
        %v1293 = vld [vmem:[%s1 + $0xf0] sm:$0xff]
        %v1294 = vld [vmem:[%s1 + $0xf8] sm:$0xff]
        %1296 = vset.pattern.permute.xlu0 0
        %1297 = vperm.xlu0 %1296, %v1184
        %v1298 = vpop.permute.xlu0 %1297
        %1301 = vset.pattern.permute.xlu0 0
        %1302 = vperm.xlu0 %1301, %v1186
        %v1303 = vpop.permute.xlu0 %1302
        %1306 = vset.pattern.permute.xlu0 0
        %1307 = vperm.xlu0 %1306, %v1189
        %v1308 = vpop.permute.xlu0 %1307
        %1311 = vset.pattern.permute.xlu0 0
        %1312 = vperm.xlu0 %1311, %v1191
        %v1313 = vpop.permute.xlu0 %1312
        %1316 = vset.pattern.permute.xlu0 0
        %1317 = vperm.xlu0 %1316, %v1194
        %v1318 = vpop.permute.xlu0 %1317
        %1321 = vset.pattern.permute.xlu0 0
        %1322 = vperm.xlu0 %1321, %v1196
        %v1323 = vpop.permute.xlu0 %1322
        %1326 = vset.pattern.permute.xlu0 0
        %1327 = vperm.xlu0 %1326, %v1199
        %v1328 = vpop.permute.xlu0 %1327
        %1331 = vset.pattern.permute.xlu0 0
        %1332 = vperm.xlu0 %1331, %v1201
        %v1333 = vpop.permute.xlu0 %1332
        %1336 = vset.pattern.permute.xlu0 0
        %1337 = vperm.xlu0 %1336, %v1204
        %v1338 = vpop.permute.xlu0 %1337
        %1341 = vset.pattern.permute.xlu0 0
        %1342 = vperm.xlu0 %1341, %v1206
        %v1343 = vpop.permute.xlu0 %1342
        %1346 = vset.pattern.permute.xlu0 0
        %1347 = vperm.xlu0 %1346, %v1209
        %v1348 = vpop.permute.xlu0 %1347
        %1351 = vset.pattern.permute.xlu0 0
        %1352 = vperm.xlu0 %1351, %v1211
        %v1353 = vpop.permute.xlu0 %1352
        %1356 = vset.pattern.permute.xlu0 0
        %1357 = vperm.xlu0 %1356, %v1214
        %v1358 = vpop.permute.xlu0 %1357
        %1361 = vset.pattern.permute.xlu0 0
        %1362 = vperm.xlu0 %1361, %v1216
        %v1363 = vpop.permute.xlu0 %1362
        %1366 = vset.pattern.permute.xlu0 0
        %1367 = vperm.xlu0 %1366, %v1219
        %v1368 = vpop.permute.xlu0 %1367
        %1371 = vset.pattern.permute.xlu0 0
        %1372 = vperm.xlu0 %1371, %v1221
        %v1373 = vpop.permute.xlu0 %1372
        %v1375 = vadd.f32 %v1298, %v1263
        %v1376 = vadd.f32 %v1298, %v1264
        %v1377 = vadd.f32 %v1303, %v1265
        %v1378 = vadd.f32 %v1303, %v1266
        %v1379 = vadd.f32 %v1308, %v1267
        %v1380 = vadd.f32 %v1308, %v1268
        %v1381 = vadd.f32 %v1313, %v1269
        %v1382 = vadd.f32 %v1313, %v1270
        %v1383 = vadd.f32 %v1318, %v1271
        %v1384 = vadd.f32 %v1318, %v1272
        %v1385 = vadd.f32 %v1323, %v1273
        %v1386 = vadd.f32 %v1323, %v1274
        %v1387 = vadd.f32 %v1328, %v1275
        %v1388 = vadd.f32 %v1328, %v1276
        %v1389 = vadd.f32 %v1333, %v1277
        %v1390 = vadd.f32 %v1333, %v1278
        %v1391 = vadd.f32 %v1338, %v1279
        %v1392 = vadd.f32 %v1338, %v1280
        %v1393 = vadd.f32 %v1343, %v1281
        %v1394 = vadd.f32 %v1343, %v1282
        %v1395 = vadd.f32 %v1348, %v1283
        %v1396 = vadd.f32 %v1348, %v1284
        %v1397 = vadd.f32 %v1353, %v1285
        %v1398 = vadd.f32 %v1353, %v1286
        %v1399 = vadd.f32 %v1358, %v1287
        %v1400 = vadd.f32 %v1358, %v1288
        %v1401 = vadd.f32 %v1363, %v1289
        %v1402 = vadd.f32 %v1363, %v1290
        %v1403 = vadd.f32 %v1368, %v1291
        %v1404 = vadd.f32 %v1368, %v1292
        %v1405 = vadd.f32 %v1373, %v1293
        %v1406 = vadd.f32 %v1373, %v1294
        %v1407 = vmax.f32 %v1375, 0.0
        %v1408 = vmax.f32 %v1376, 0.0
        %v1409 = vmax.f32 %v1377, 0.0
        %v1410 = vmax.f32 %v1378, 0.0
        %v1411 = vmax.f32 %v1379, 0.0
        %v1412 = vmax.f32 %v1380, 0.0
        %v1413 = vmax.f32 %v1381, 0.0
        %v1414 = vmax.f32 %v1382, 0.0
        %v1415 = vmax.f32 %v1383, 0.0
        %v1416 = vmax.f32 %v1384, 0.0
        %v1417 = vmax.f32 %v1385, 0.0
        %v1418 = vmax.f32 %v1386, 0.0
        %v1419 = vmax.f32 %v1387, 0.0
        %v1420 = vmax.f32 %v1388, 0.0
        %v1421 = vmax.f32 %v1389, 0.0
        %v1422 = vmax.f32 %v1390, 0.0
        %v1423 = vmax.f32 %v1391, 0.0
        %v1424 = vmax.f32 %v1392, 0.0
        %v1425 = vmax.f32 %v1393, 0.0
        %v1426 = vmax.f32 %v1394, 0.0
        %v1427 = vmax.f32 %v1395, 0.0
        %v1428 = vmax.f32 %v1396, 0.0
        %v1429 = vmax.f32 %v1397, 0.0
        %v1430 = vmax.f32 %v1398, 0.0
        %v1431 = vmax.f32 %v1399, 0.0
        %v1432 = vmax.f32 %v1400, 0.0
        %v1433 = vmax.f32 %v1401, 0.0
        %v1434 = vmax.f32 %v1402, 0.0
        %v1435 = vmax.f32 %v1403, 0.0
        %v1436 = vmax.f32 %v1404, 0.0
        %v1437 = vmax.f32 %v1405, 0.0
        %v1438 = vmax.f32 %v1406, 0.0
        %v1439 = vpack.c.bf16 %v1409, %v1407
        %v1440 = vpack.c.bf16 %v1410, %v1408
        %v1441 = vpack.c.bf16 %v1413, %v1411
        %v1442 = vpack.c.bf16 %v1414, %v1412
        %v1443 = vpack.c.bf16 %v1417, %v1415
        %v1444 = vpack.c.bf16 %v1418, %v1416
        %v1445 = vpack.c.bf16 %v1421, %v1419
        %v1446 = vpack.c.bf16 %v1422, %v1420
        %v1447 = vpack.c.bf16 %v1425, %v1423
        %v1448 = vpack.c.bf16 %v1426, %v1424
        %v1449 = vpack.c.bf16 %v1429, %v1427
        %v1450 = vpack.c.bf16 %v1430, %v1428
        %v1451 = vpack.c.bf16 %v1433, %v1431
        %v1452 = vpack.c.bf16 %v1434, %v1432
        %v1453 = vpack.c.bf16 %v1437, %v1435
        %v1454 = vpack.c.bf16 %v1438, %v1436
        %1455 = vset.pattern.permute.xlu0 3
        %1456 = vperm.xlu0 %1455, %v411
        %v1457 = vpop.permute.xlu0 %1456
        %1459 = vset.pattern.permute.xlu0 3
        %1460 = vperm.xlu0 %1459, %v412
        %v1461 = vpop.permute.xlu0 %1460
        %1463 = vset.pattern.permute.xlu0 3
        %1464 = vperm.xlu0 %1463, %v413
        %v1465 = vpop.permute.xlu0 %1464
        %1467 = vset.pattern.permute.xlu0 3
        %1468 = vperm.xlu0 %1467, %v414
        %v1469 = vpop.permute.xlu0 %1468
        %1471 = vset.pattern.permute.xlu0 3
        %1472 = vperm.xlu0 %1471, %v415
        %v1473 = vpop.permute.xlu0 %1472
        %1475 = vset.pattern.permute.xlu0 3
        %1476 = vperm.xlu0 %1475, %v416
        %v1477 = vpop.permute.xlu0 %1476
        %1479 = vset.pattern.permute.xlu0 3
        %1480 = vperm.xlu0 %1479, %v417
        %v1481 = vpop.permute.xlu0 %1480
        %1483 = vset.pattern.permute.xlu0 3
        %1484 = vperm.xlu0 %1483, %v418
        %v1485 = vpop.permute.xlu0 %1484
        %v1495 = vunpack.c.l.b16 %v353
        %v1496 = vunpack.c.l.b16 %v354
        %v1497 = vunpack.c.l.b16 %v355
        %v1498 = vunpack.c.l.b16 %v356
        %v1499 = vunpack.c.l.b16 %v357
        %v1500 = vunpack.c.l.b16 %v358
        %v1501 = vunpack.c.l.b16 %v359
        %v1502 = vunpack.c.l.b16 %v360
        %v1503 = vpack.c.b16 %v1496, %v1495
        %v1504 = vpack.c.b16 %v1498, %v1497
        %v1505 = vpack.c.b16 %v1500, %v1499
        %v1506 = vpack.c.b16 %v1502, %v1501
        %1511 = vmatpush.bf16.msra.mxu0 %v1453
        %1512 = vmatpush.bf16.msra.mxu0 %v1451
        %1513 = vmatpush.bf16.msra.mxu0 %v1449
        %1514 = vmatpush.bf16.msra.mxu0 %v1447
        %1515 = vmatpush.bf16.msra.mxu0 %v1445
        %1516 = vmatpush.bf16.msra.mxu0 %v1443
        %1517 = vmatpush.bf16.msra.mxu0 %v1441
        %1518 = vmatpush.bf16.msra.mxu0 %v1439
        %1519 = vmatmul.bf16.gmra.mxu0 %v1503
        %v1520 = vpop.f32.mrf.mxu0
        %v1521 = vadd.f32 %v1457, %v1520
        %v1522 = vpop.f32.mrf.mxu0
        %v1523 = vadd.f32 %v1461, %v1522
        %1524 = vmatmul.bf16.gmra.mxu0 %v1504
        %v1525 = vpop.f32.mrf.mxu0
        %v1526 = vadd.f32 %v1465, %v1525
        %v1527 = vpop.f32.mrf.mxu0
        %v1528 = vadd.f32 %v1469, %v1527
        %1529 = vmatmul.bf16.gmra.mxu0 %v1505
        %v1530 = vpop.f32.mrf.mxu0
        %v1531 = vadd.f32 %v1473, %v1530
        %v1532 = vpop.f32.mrf.mxu0
        %v1533 = vadd.f32 %v1477, %v1532
        %1534 = vmatmul.bf16.gmra.mxu0 %v1506
        %v1535 = vpop.f32.mrf.mxu0
        %v1536 = vadd.f32 %v1481, %v1535
        %v1537 = vpop.f32.mrf.mxu0
        %v1538 = vadd.f32 %v1485, %v1537
        %1539 = vdwg.mxu0
        %1540 = vmatpush.bf16.msra.mxu0 %v1454
        %1541 = vmatpush.bf16.msra.mxu0 %v1452
        %1542 = vmatpush.bf16.msra.mxu0 %v1450
        %1543 = vmatpush.bf16.msra.mxu0 %v1448
        %1544 = vmatpush.bf16.msra.mxu0 %v1446
        %1545 = vmatpush.bf16.msra.mxu0 %v1444
        %1546 = vmatpush.bf16.msra.mxu0 %v1442
        %1547 = vmatpush.bf16.msra.mxu0 %v1440
        %1548 = vmatmul.bf16.gmra.mxu0 %v1503
        %v1549 = vpop.f32.mrf.mxu0
        %v1550 = vadd.f32 %v1457, %v1549
        %v1551 = vpop.f32.mrf.mxu0
        %v1552 = vadd.f32 %v1461, %v1551
        %1553 = vmatmul.bf16.gmra.mxu0 %v1504
        %v1554 = vpop.f32.mrf.mxu0
        %v1555 = vadd.f32 %v1465, %v1554
        %v1556 = vpop.f32.mrf.mxu0
        %v1557 = vadd.f32 %v1469, %v1556
        %1558 = vmatmul.bf16.gmra.mxu0 %v1505
        %v1559 = vpop.f32.mrf.mxu0
        %v1560 = vadd.f32 %v1473, %v1559
        %v1561 = vpop.f32.mrf.mxu0
        %v1562 = vadd.f32 %v1477, %v1561
        %1563 = vmatmul.bf16.gmra.mxu0 %v1506
        %v1564 = vpop.f32.mrf.mxu0
        %v1565 = vadd.f32 %v1481, %v1564
        %v1566 = vpop.f32.mrf.mxu0
        %v1567 = vadd.f32 %v1485, %v1566
        %1568 = vdwg.mxu0
        %v1569 = vmax.f32 %v1521, 0.0
        %v1570 = vmax.f32 %v1550, 0.0
        %v1571 = vmax.f32 %v1523, 0.0
        %v1572 = vmax.f32 %v1552, 0.0
        %v1573 = vmax.f32 %v1526, 0.0
        %v1574 = vmax.f32 %v1555, 0.0
        %v1575 = vmax.f32 %v1528, 0.0
        %v1576 = vmax.f32 %v1557, 0.0
        %v1577 = vmax.f32 %v1531, 0.0
        %v1578 = vmax.f32 %v1560, 0.0
        %v1579 = vmax.f32 %v1533, 0.0
        %v1580 = vmax.f32 %v1562, 0.0
        %v1581 = vmax.f32 %v1536, 0.0
        %v1582 = vmax.f32 %v1565, 0.0
        %v1583 = vmax.f32 %v1538, 0.0
        %v1584 = vmax.f32 %v1567, 0.0
        %v1585 = vpack.c.bf16 %v1571, %v1569
        %v1586 = vpack.c.bf16 %v1572, %v1570
        %v1587 = vpack.c.bf16 %v1575, %v1573
        %v1588 = vpack.c.bf16 %v1576, %v1574
        %v1589 = vpack.c.bf16 %v1579, %v1577
        %v1590 = vpack.c.bf16 %v1580, %v1578
        %v1591 = vpack.c.bf16 %v1583, %v1581
        %v1592 = vpack.c.bf16 %v1584, %v1582
        %1593 = vset.pattern.permute.xlu0 4
        %1594 = vperm.xlu0 %1593, %v411
        %v1595 = vpop.permute.xlu0 %1594
        %v1598 = vsel %vm746, %v385, 0
        %1600 = vmatpush.bf16.msra.mxu0 0
        %1601 = vmatpush.bf16.msra.mxu0 0
        %1602 = vmatpush.bf16.msra.mxu0 0
        %1603 = vmatpush.bf16.msra.mxu0 0
        %1604 = vmatpush.bf16.msra.mxu0 %v1591
        %1605 = vmatpush.bf16.msra.mxu0 %v1589
        %1606 = vmatpush.bf16.msra.mxu0 %v1587
        %1607 = vmatpush.bf16.msra.mxu0 %v1585
        %1608 = vmatmul.bf16.gmra.mxu0 %v1598
        %v1609 = vpop.f32.mrf.mxu0
        %v1610 = vadd.f32 %v1595, %v1609
        %v1611 = vpop.f32.mrf.mxu0
        %1612 = vdwg.mxu0
        %1613 = vmatpush.bf16.msra.mxu0 0
        %1614 = vmatpush.bf16.msra.mxu0 0
        %1615 = vmatpush.bf16.msra.mxu0 0
        %1616 = vmatpush.bf16.msra.mxu0 0
        %1617 = vmatpush.bf16.msra.mxu0 %v1592
        %1618 = vmatpush.bf16.msra.mxu0 %v1590
        %1619 = vmatpush.bf16.msra.mxu0 %v1588
        %1620 = vmatpush.bf16.msra.mxu0 %v1586
        %1621 = vmatmul.bf16.gmra.mxu0 %v1598
        %v1622 = vpop.f32.mrf.mxu0
        %v1623 = vadd.f32 %v1595, %v1622
        %v1624 = vpop.f32.mrf.mxu0
        %1625 = vdwg.mxu0
        %1627 = vset.pattern.permute.xlu0 0
        %1628 = vperm.xlu0 %1627, %v395
        %v1629 = vpop.permute.xlu0 %1628
        %1632 = vset.pattern.permute.xlu0 0
        %1633 = vperm.xlu0 %1632, %v396
        %v1634 = vpop.permute.xlu0 %1633
        %1637 = vset.pattern.permute.xlu0 0
        %1638 = vperm.xlu0 %1637, %v397
        %v1639 = vpop.permute.xlu0 %1638
        %1642 = vset.pattern.permute.xlu0 0
        %1643 = vperm.xlu0 %1642, %v398
        %v1644 = vpop.permute.xlu0 %1643
        %1647 = vset.pattern.permute.xlu0 0
        %1648 = vperm.xlu0 %1647, %v399
        %v1649 = vpop.permute.xlu0 %1648
        %1652 = vset.pattern.permute.xlu0 0
        %1653 = vperm.xlu0 %1652, %v400
        %v1654 = vpop.permute.xlu0 %1653
        %1657 = vset.pattern.permute.xlu0 0
        %1658 = vperm.xlu0 %1657, %v401
        %v1659 = vpop.permute.xlu0 %1658
        %1662 = vset.pattern.permute.xlu0 0
        %1663 = vperm.xlu0 %1662, %v402
        %v1664 = vpop.permute.xlu0 %1663
        %1667 = vset.pattern.permute.xlu0 0
        %1668 = vperm.xlu0 %1667, %v403
        %v1669 = vpop.permute.xlu0 %1668
        %1672 = vset.pattern.permute.xlu0 0
        %1673 = vperm.xlu0 %1672, %v404
        %v1674 = vpop.permute.xlu0 %1673
        %1677 = vset.pattern.permute.xlu0 0
        %1678 = vperm.xlu0 %1677, %v405
        %v1679 = vpop.permute.xlu0 %1678
        %1682 = vset.pattern.permute.xlu0 0
        %1683 = vperm.xlu0 %1682, %v406
        %v1684 = vpop.permute.xlu0 %1683
        %1687 = vset.pattern.permute.xlu0 0
        %1688 = vperm.xlu0 %1687, %v407
        %v1689 = vpop.permute.xlu0 %1688
        %1692 = vset.pattern.permute.xlu0 0
        %1693 = vperm.xlu0 %1692, %v408
        %v1694 = vpop.permute.xlu0 %1693
        %1697 = vset.pattern.permute.xlu0 0
        %1698 = vperm.xlu0 %1697, %v409
        %v1699 = vpop.permute.xlu0 %1698
        %1702 = vset.pattern.permute.xlu0 0
        %1703 = vperm.xlu0 %1702, %v410
        %v1704 = vpop.permute.xlu0 %1703
        %v1706 = vperm.slane %v1610, 0
        %v1707 = vperm.slane %v1623, 0
        %v1708 = vmul.f32 %v1629, %v1706
        %v1709 = vmul.f32 %v1629, %v1707
        %v1710 = vmul.f32 %v1634, %v1706
        %v1711 = vmul.f32 %v1634, %v1707
        %v1712 = vmul.f32 %v1639, %v1706
        %v1713 = vmul.f32 %v1639, %v1707
        %v1714 = vmul.f32 %v1644, %v1706
        %v1715 = vmul.f32 %v1644, %v1707
        %v1716 = vmul.f32 %v1649, %v1706
        %v1717 = vmul.f32 %v1649, %v1707
        %v1718 = vmul.f32 %v1654, %v1706
        %v1719 = vmul.f32 %v1654, %v1707
        %v1720 = vmul.f32 %v1659, %v1706
        %v1721 = vmul.f32 %v1659, %v1707
        %v1722 = vmul.f32 %v1664, %v1706
        %v1723 = vmul.f32 %v1664, %v1707
        %v1724 = vmul.f32 %v1669, %v1706
        %v1725 = vmul.f32 %v1669, %v1707
        %v1726 = vmul.f32 %v1674, %v1706
        %v1727 = vmul.f32 %v1674, %v1707
        %v1728 = vmul.f32 %v1679, %v1706
        %v1729 = vmul.f32 %v1679, %v1707
        %v1730 = vmul.f32 %v1684, %v1706
        %v1731 = vmul.f32 %v1684, %v1707
        %v1732 = vmul.f32 %v1689, %v1706
        %v1733 = vmul.f32 %v1689, %v1707
        %v1734 = vmul.f32 %v1694, %v1706
        %v1735 = vmul.f32 %v1694, %v1707
        %v1736 = vmul.f32 %v1699, %v1706
        %v1737 = vmul.f32 %v1699, %v1707
        %v1738 = vmul.f32 %v1704, %v1706
        %v1739 = vmul.f32 %v1704, %v1707
        %1741 = vset.pattern.permute.xlu0 0
        %1742 = vperm.xlu0 %1741, %v1224
        %v1743 = vpop.permute.xlu0 %1742
        %1746 = vset.pattern.permute.xlu0 0
        %1747 = vperm.xlu0 %1746, %v1226
        %v1748 = vpop.permute.xlu0 %1747
        %1751 = vset.pattern.permute.xlu0 0
        %1752 = vperm.xlu0 %1751, %v1229
        %v1753 = vpop.permute.xlu0 %1752
        %1756 = vset.pattern.permute.xlu0 0
        %1757 = vperm.xlu0 %1756, %v1231
        %v1758 = vpop.permute.xlu0 %1757
        %1761 = vset.pattern.permute.xlu0 0
        %1762 = vperm.xlu0 %1761, %v1234
        %v1763 = vpop.permute.xlu0 %1762
        %1766 = vset.pattern.permute.xlu0 0
        %1767 = vperm.xlu0 %1766, %v1236
        %v1768 = vpop.permute.xlu0 %1767
        %1771 = vset.pattern.permute.xlu0 0
        %1772 = vperm.xlu0 %1771, %v1239
        %v1773 = vpop.permute.xlu0 %1772
        %1776 = vset.pattern.permute.xlu0 0
        %1777 = vperm.xlu0 %1776, %v1241
        %v1778 = vpop.permute.xlu0 %1777
        %1781 = vset.pattern.permute.xlu0 0
        %1782 = vperm.xlu0 %1781, %v1244
        %v1783 = vpop.permute.xlu0 %1782
        %1786 = vset.pattern.permute.xlu0 0
        %1787 = vperm.xlu0 %1786, %v1246
        %v1788 = vpop.permute.xlu0 %1787
        %1791 = vset.pattern.permute.xlu0 0
        %1792 = vperm.xlu0 %1791, %v1249
        %v1793 = vpop.permute.xlu0 %1792
        %1796 = vset.pattern.permute.xlu0 0
        %1797 = vperm.xlu0 %1796, %v1251
        %v1798 = vpop.permute.xlu0 %1797
        %1801 = vset.pattern.permute.xlu0 0
        %1802 = vperm.xlu0 %1801, %v1254
        %v1803 = vpop.permute.xlu0 %1802
        %1806 = vset.pattern.permute.xlu0 0
        %1807 = vperm.xlu0 %1806, %v1256
        %v1808 = vpop.permute.xlu0 %1807
        %1811 = vset.pattern.permute.xlu0 0
        %1812 = vperm.xlu0 %1811, %v1259
        %v1813 = vpop.permute.xlu0 %1812
        %1816 = vset.pattern.permute.xlu0 0
        %1817 = vperm.xlu0 %1816, %v1261
        %v1818 = vpop.permute.xlu0 %1817
        %v1820 = vadd.f32 %v1743, %v1708
        %v1821 = vadd.f32 %v1743, %v1709
        %v1822 = vadd.f32 %v1748, %v1710
        %v1823 = vadd.f32 %v1748, %v1711
        %v1824 = vadd.f32 %v1753, %v1712
        %v1825 = vadd.f32 %v1753, %v1713
        %v1826 = vadd.f32 %v1758, %v1714
        %v1827 = vadd.f32 %v1758, %v1715
        %v1828 = vadd.f32 %v1763, %v1716
        %v1829 = vadd.f32 %v1763, %v1717
        %v1830 = vadd.f32 %v1768, %v1718
        %v1831 = vadd.f32 %v1768, %v1719
        %v1832 = vadd.f32 %v1773, %v1720
        %v1833 = vadd.f32 %v1773, %v1721
        %v1834 = vadd.f32 %v1778, %v1722
        %v1835 = vadd.f32 %v1778, %v1723
        %v1836 = vadd.f32 %v1783, %v1724
        %v1837 = vadd.f32 %v1783, %v1725
        %v1838 = vadd.f32 %v1788, %v1726
        %v1839 = vadd.f32 %v1788, %v1727
        %v1840 = vadd.f32 %v1793, %v1728
        %v1841 = vadd.f32 %v1793, %v1729
        %v1842 = vadd.f32 %v1798, %v1730
        %v1843 = vadd.f32 %v1798, %v1731
        %v1844 = vadd.f32 %v1803, %v1732
        %v1845 = vadd.f32 %v1803, %v1733
        %v1846 = vadd.f32 %v1808, %v1734
        %v1847 = vadd.f32 %v1808, %v1735
        %v1848 = vadd.f32 %v1813, %v1736
        %v1849 = vadd.f32 %v1813, %v1737
        %v1850 = vadd.f32 %v1818, %v1738
        %v1851 = vadd.f32 %v1818, %v1739
        %1852 = vset.pattern.permute.xlu0 1
        %1853 = vperm.xlu0 %1852, %v395
        %v1854 = vpop.permute.xlu0 %1853
        %1856 = vset.pattern.permute.xlu0 1
        %1857 = vperm.xlu0 %1856, %v396
        %v1858 = vpop.permute.xlu0 %1857
        %1860 = vset.pattern.permute.xlu0 1
        %1861 = vperm.xlu0 %1860, %v397
        %v1862 = vpop.permute.xlu0 %1861
        %1864 = vset.pattern.permute.xlu0 1
        %1865 = vperm.xlu0 %1864, %v398
        %v1866 = vpop.permute.xlu0 %1865
        %1868 = vset.pattern.permute.xlu0 1
        %1869 = vperm.xlu0 %1868, %v399
        %v1870 = vpop.permute.xlu0 %1869
        %1872 = vset.pattern.permute.xlu0 1
        %1873 = vperm.xlu0 %1872, %v400
        %v1874 = vpop.permute.xlu0 %1873
        %1876 = vset.pattern.permute.xlu0 1
        %1877 = vperm.xlu0 %1876, %v401
        %v1878 = vpop.permute.xlu0 %1877
        %1880 = vset.pattern.permute.xlu0 1
        %1881 = vperm.xlu0 %1880, %v402
        %v1882 = vpop.permute.xlu0 %1881
        %1884 = vset.pattern.permute.xlu0 1
        %1885 = vperm.xlu0 %1884, %v403
        %v1886 = vpop.permute.xlu0 %1885
        %1888 = vset.pattern.permute.xlu0 1
        %1889 = vperm.xlu0 %1888, %v404
        %v1890 = vpop.permute.xlu0 %1889
        %1892 = vset.pattern.permute.xlu0 1
        %1893 = vperm.xlu0 %1892, %v405
        %v1894 = vpop.permute.xlu0 %1893
        %1896 = vset.pattern.permute.xlu0 1
        %1897 = vperm.xlu0 %1896, %v406
        %v1898 = vpop.permute.xlu0 %1897
        %1900 = vset.pattern.permute.xlu0 1
        %1901 = vperm.xlu0 %1900, %v407
        %v1902 = vpop.permute.xlu0 %1901
        %1904 = vset.pattern.permute.xlu0 1
        %1905 = vperm.xlu0 %1904, %v408
        %v1906 = vpop.permute.xlu0 %1905
        %1908 = vset.pattern.permute.xlu0 1
        %1909 = vperm.xlu0 %1908, %v409
        %v1910 = vpop.permute.xlu0 %1909
        %1912 = vset.pattern.permute.xlu0 1
        %1913 = vperm.xlu0 %1912, %v410
        %v1914 = vpop.permute.xlu0 %1913
        %v1916 = vperm.slane %v1610, 1
        %v1917 = vperm.slane %v1623, 1
        %v1918 = vmul.f32 %v1854, %v1916
        %v1919 = vmul.f32 %v1854, %v1917
        %v1920 = vmul.f32 %v1858, %v1916
        %v1921 = vmul.f32 %v1858, %v1917
        %v1922 = vmul.f32 %v1862, %v1916
        %v1923 = vmul.f32 %v1862, %v1917
        %v1924 = vmul.f32 %v1866, %v1916
        %v1925 = vmul.f32 %v1866, %v1917
        %v1926 = vmul.f32 %v1870, %v1916
        %v1927 = vmul.f32 %v1870, %v1917
        %v1928 = vmul.f32 %v1874, %v1916
        %v1929 = vmul.f32 %v1874, %v1917
        %v1930 = vmul.f32 %v1878, %v1916
        %v1931 = vmul.f32 %v1878, %v1917
        %v1932 = vmul.f32 %v1882, %v1916
        %v1933 = vmul.f32 %v1882, %v1917
        %v1934 = vmul.f32 %v1886, %v1916
        %v1935 = vmul.f32 %v1886, %v1917
        %v1936 = vmul.f32 %v1890, %v1916
        %v1937 = vmul.f32 %v1890, %v1917
        %v1938 = vmul.f32 %v1894, %v1916
        %v1939 = vmul.f32 %v1894, %v1917
        %v1940 = vmul.f32 %v1898, %v1916
        %v1941 = vmul.f32 %v1898, %v1917
        %v1942 = vmul.f32 %v1902, %v1916
        %v1943 = vmul.f32 %v1902, %v1917
        %v1944 = vmul.f32 %v1906, %v1916
        %v1945 = vmul.f32 %v1906, %v1917
        %v1946 = vmul.f32 %v1910, %v1916
        %v1947 = vmul.f32 %v1910, %v1917
        %v1948 = vmul.f32 %v1914, %v1916
        %v1949 = vmul.f32 %v1914, %v1917
        %v1950 = vadd.f32 %v1820, %v1918
        %v1951 = vadd.f32 %v1821, %v1919
        %v1952 = vadd.f32 %v1822, %v1920
        %v1953 = vadd.f32 %v1823, %v1921
        %v1954 = vadd.f32 %v1824, %v1922
        %v1955 = vadd.f32 %v1825, %v1923
        %v1956 = vadd.f32 %v1826, %v1924
        %v1957 = vadd.f32 %v1827, %v1925
        %v1958 = vadd.f32 %v1828, %v1926
        %v1959 = vadd.f32 %v1829, %v1927
        %v1960 = vadd.f32 %v1830, %v1928
        %v1961 = vadd.f32 %v1831, %v1929
        %v1962 = vadd.f32 %v1832, %v1930
        %v1963 = vadd.f32 %v1833, %v1931
        %v1964 = vadd.f32 %v1834, %v1932
        %v1965 = vadd.f32 %v1835, %v1933
        %v1966 = vadd.f32 %v1836, %v1934
        %v1967 = vadd.f32 %v1837, %v1935
        %v1968 = vadd.f32 %v1838, %v1936
        %v1969 = vadd.f32 %v1839, %v1937
        %v1970 = vadd.f32 %v1840, %v1938
        %v1971 = vadd.f32 %v1841, %v1939
        %v1972 = vadd.f32 %v1842, %v1940
        %v1973 = vadd.f32 %v1843, %v1941
        %v1974 = vadd.f32 %v1844, %v1942
        %v1975 = vadd.f32 %v1845, %v1943
        %v1976 = vadd.f32 %v1846, %v1944
        %v1977 = vadd.f32 %v1847, %v1945
        %v1978 = vadd.f32 %v1848, %v1946
        %v1979 = vadd.f32 %v1849, %v1947
        %v1980 = vadd.f32 %v1850, %v1948
        %v1981 = vadd.f32 %v1851, %v1949
        %1982 = vset.pattern.permute.xlu0 2
        %1983 = vperm.xlu0 %1982, %v395
        %v1984 = vpop.permute.xlu0 %1983
        %1986 = vset.pattern.permute.xlu0 2
        %1987 = vperm.xlu0 %1986, %v396
        %v1988 = vpop.permute.xlu0 %1987
        %1990 = vset.pattern.permute.xlu0 2
        %1991 = vperm.xlu0 %1990, %v397
        %v1992 = vpop.permute.xlu0 %1991
        %1994 = vset.pattern.permute.xlu0 2
        %1995 = vperm.xlu0 %1994, %v398
        %v1996 = vpop.permute.xlu0 %1995
        %1998 = vset.pattern.permute.xlu0 2
        %1999 = vperm.xlu0 %1998, %v399
        %v2000 = vpop.permute.xlu0 %1999
        %2002 = vset.pattern.permute.xlu0 2
        %2003 = vperm.xlu0 %2002, %v400
        %v2004 = vpop.permute.xlu0 %2003
        %2006 = vset.pattern.permute.xlu0 2
        %2007 = vperm.xlu0 %2006, %v401
        %v2008 = vpop.permute.xlu0 %2007
        %2010 = vset.pattern.permute.xlu0 2
        %2011 = vperm.xlu0 %2010, %v402
        %v2012 = vpop.permute.xlu0 %2011
        %2014 = vset.pattern.permute.xlu0 2
        %2015 = vperm.xlu0 %2014, %v403
        %v2016 = vpop.permute.xlu0 %2015
        %2018 = vset.pattern.permute.xlu0 2
        %2019 = vperm.xlu0 %2018, %v404
        %v2020 = vpop.permute.xlu0 %2019
        %2022 = vset.pattern.permute.xlu0 2
        %2023 = vperm.xlu0 %2022, %v405
        %v2024 = vpop.permute.xlu0 %2023
        %2026 = vset.pattern.permute.xlu0 2
        %2027 = vperm.xlu0 %2026, %v406
        %v2028 = vpop.permute.xlu0 %2027
        %2030 = vset.pattern.permute.xlu0 2
        %2031 = vperm.xlu0 %2030, %v407
        %v2032 = vpop.permute.xlu0 %2031
        %2034 = vset.pattern.permute.xlu0 2
        %2035 = vperm.xlu0 %2034, %v408
        %v2036 = vpop.permute.xlu0 %2035
        %2038 = vset.pattern.permute.xlu0 2
        %2039 = vperm.xlu0 %2038, %v409
        %v2040 = vpop.permute.xlu0 %2039
        %2042 = vset.pattern.permute.xlu0 2
        %2043 = vperm.xlu0 %2042, %v410
        %v2044 = vpop.permute.xlu0 %2043
        %v2046 = vperm.slane %v1610, 2
        %v2047 = vperm.slane %v1623, 2
        %v2048 = vmul.f32 %v1984, %v2046
        %v2049 = vmul.f32 %v1984, %v2047
        %v2050 = vmul.f32 %v1988, %v2046
        %v2051 = vmul.f32 %v1988, %v2047
        %v2052 = vmul.f32 %v1992, %v2046
        %v2053 = vmul.f32 %v1992, %v2047
        %v2054 = vmul.f32 %v1996, %v2046
        %v2055 = vmul.f32 %v1996, %v2047
        %v2056 = vmul.f32 %v2000, %v2046
        %v2057 = vmul.f32 %v2000, %v2047
        %v2058 = vmul.f32 %v2004, %v2046
        %v2059 = vmul.f32 %v2004, %v2047
        %v2060 = vmul.f32 %v2008, %v2046
        %v2061 = vmul.f32 %v2008, %v2047
        %v2062 = vmul.f32 %v2012, %v2046
        %v2063 = vmul.f32 %v2012, %v2047
        %v2064 = vmul.f32 %v2016, %v2046
        %v2065 = vmul.f32 %v2016, %v2047
        %v2066 = vmul.f32 %v2020, %v2046
        %v2067 = vmul.f32 %v2020, %v2047
        %v2068 = vmul.f32 %v2024, %v2046
        %v2069 = vmul.f32 %v2024, %v2047
        %v2070 = vmul.f32 %v2028, %v2046
        %v2071 = vmul.f32 %v2028, %v2047
        %v2072 = vmul.f32 %v2032, %v2046
        %v2073 = vmul.f32 %v2032, %v2047
        %v2074 = vmul.f32 %v2036, %v2046
        %v2075 = vmul.f32 %v2036, %v2047
        %v2076 = vmul.f32 %v2040, %v2046
        %v2077 = vmul.f32 %v2040, %v2047
        %v2078 = vmul.f32 %v2044, %v2046
        %v2079 = vmul.f32 %v2044, %v2047
        %v2080 = vadd.f32 %v1950, %v2048
        %v2081 = vadd.f32 %v1951, %v2049
        %v2082 = vadd.f32 %v1952, %v2050
        %v2083 = vadd.f32 %v1953, %v2051
        %v2084 = vadd.f32 %v1954, %v2052
        %v2085 = vadd.f32 %v1955, %v2053
        %v2086 = vadd.f32 %v1956, %v2054
        %v2087 = vadd.f32 %v1957, %v2055
        %v2088 = vadd.f32 %v1958, %v2056
        %v2089 = vadd.f32 %v1959, %v2057
        %v2090 = vadd.f32 %v1960, %v2058
        %v2091 = vadd.f32 %v1961, %v2059
        %v2092 = vadd.f32 %v1962, %v2060
        %v2093 = vadd.f32 %v1963, %v2061
        %v2094 = vadd.f32 %v1964, %v2062
        %v2095 = vadd.f32 %v1965, %v2063
        %v2096 = vadd.f32 %v1966, %v2064
        %v2097 = vadd.f32 %v1967, %v2065
        %v2098 = vadd.f32 %v1968, %v2066
        %v2099 = vadd.f32 %v1969, %v2067
        %v2100 = vadd.f32 %v1970, %v2068
        %v2101 = vadd.f32 %v1971, %v2069
        %v2102 = vadd.f32 %v1972, %v2070
        %v2103 = vadd.f32 %v1973, %v2071
        %v2104 = vadd.f32 %v1974, %v2072
        %v2105 = vadd.f32 %v1975, %v2073
        %v2106 = vadd.f32 %v1976, %v2074
        %v2107 = vadd.f32 %v1977, %v2075
        %v2108 = vadd.f32 %v1978, %v2076
        %v2109 = vadd.f32 %v1979, %v2077
        %v2110 = vadd.f32 %v1980, %v2078
        %v2111 = vadd.f32 %v1981, %v2079
        %2112 = vset.pattern.permute.xlu0 5
        %2113 = vperm.xlu0 %2112, %v411
        %v2114 = vpop.permute.xlu0 %2113
        %2116 = vset.pattern.permute.xlu0 5
        %2117 = vperm.xlu0 %2116, %v412
        %v2118 = vpop.permute.xlu0 %2117
        %2120 = vset.pattern.permute.xlu0 5
        %2121 = vperm.xlu0 %2120, %v413
        %v2122 = vpop.permute.xlu0 %2121
        %2124 = vset.pattern.permute.xlu0 5
        %2125 = vperm.xlu0 %2124, %v414
        %v2126 = vpop.permute.xlu0 %2125
        %2128 = vset.pattern.permute.xlu0 5
        %2129 = vperm.xlu0 %2128, %v415
        %v2130 = vpop.permute.xlu0 %2129
        %2132 = vset.pattern.permute.xlu0 5
        %2133 = vperm.xlu0 %2132, %v416
        %v2134 = vpop.permute.xlu0 %2133
        %2136 = vset.pattern.permute.xlu0 5
        %2137 = vperm.xlu0 %2136, %v417
        %v2138 = vpop.permute.xlu0 %2137
        %2140 = vset.pattern.permute.xlu0 5
        %2141 = vperm.xlu0 %2140, %v418
        %v2142 = vpop.permute.xlu0 %2141
        %2144 = vset.pattern.permute.xlu0 5
        %2145 = vperm.xlu0 %2144, %v419
        %v2146 = vpop.permute.xlu0 %2145
        %2148 = vset.pattern.permute.xlu0 5
        %2149 = vperm.xlu0 %2148, %v420
        %v2150 = vpop.permute.xlu0 %2149
        %2152 = vset.pattern.permute.xlu0 5
        %2153 = vperm.xlu0 %2152, %v421
        %v2154 = vpop.permute.xlu0 %2153
        %2156 = vset.pattern.permute.xlu0 5
        %2157 = vperm.xlu0 %2156, %v422
        %v2158 = vpop.permute.xlu0 %2157
        %2160 = vset.pattern.permute.xlu0 5
        %2161 = vperm.xlu0 %2160, %v423
        %v2162 = vpop.permute.xlu0 %2161
        %2164 = vset.pattern.permute.xlu0 5
        %2165 = vperm.xlu0 %2164, %v424
        %v2166 = vpop.permute.xlu0 %2165
        %2168 = vset.pattern.permute.xlu0 5
        %2169 = vperm.xlu0 %2168, %v425
        %v2170 = vpop.permute.xlu0 %2169
        %2172 = vset.pattern.permute.xlu0 5
        %2173 = vperm.xlu0 %2172, %v426
        %v2174 = vpop.permute.xlu0 %2173
        %v2176 = vadd.f32 %v2080, %v2114
        %v2177 = vadd.f32 %v2081, %v2114
        %v2178 = vadd.f32 %v2082, %v2118
        %v2179 = vadd.f32 %v2083, %v2118
        %v2180 = vadd.f32 %v2084, %v2122
        %v2181 = vadd.f32 %v2085, %v2122
        %v2182 = vadd.f32 %v2086, %v2126
        %v2183 = vadd.f32 %v2087, %v2126
        %v2184 = vadd.f32 %v2088, %v2130
        %v2185 = vadd.f32 %v2089, %v2130
        %v2186 = vadd.f32 %v2090, %v2134
        %v2187 = vadd.f32 %v2091, %v2134
        %v2188 = vadd.f32 %v2092, %v2138
        %v2189 = vadd.f32 %v2093, %v2138
        %v2190 = vadd.f32 %v2094, %v2142
        %v2191 = vadd.f32 %v2095, %v2142
        %v2192 = vadd.f32 %v2096, %v2146
        %v2193 = vadd.f32 %v2097, %v2146
        %v2194 = vadd.f32 %v2098, %v2150
        %v2195 = vadd.f32 %v2099, %v2150
        %v2196 = vadd.f32 %v2100, %v2154
        %v2197 = vadd.f32 %v2101, %v2154
        %v2198 = vadd.f32 %v2102, %v2158
        %v2199 = vadd.f32 %v2103, %v2158
        %v2200 = vadd.f32 %v2104, %v2162
        %v2201 = vadd.f32 %v2105, %v2162
        %v2202 = vadd.f32 %v2106, %v2166
        %v2203 = vadd.f32 %v2107, %v2166
        %v2204 = vadd.f32 %v2108, %v2170
        %v2205 = vadd.f32 %v2109, %v2170
        %v2206 = vadd.f32 %v2110, %v2174
        %v2207 = vadd.f32 %v2111, %v2174
        %v2208 = vmax.f32 %v2176, 0.0
        %v2209 = vmax.f32 %v2177, 0.0
        %v2210 = vmax.f32 %v2178, 0.0
        %v2211 = vmax.f32 %v2179, 0.0
        %v2212 = vmax.f32 %v2180, 0.0
        %v2213 = vmax.f32 %v2181, 0.0
        %v2214 = vmax.f32 %v2182, 0.0
        %v2215 = vmax.f32 %v2183, 0.0
        %v2216 = vmax.f32 %v2184, 0.0
        %v2217 = vmax.f32 %v2185, 0.0
        %v2218 = vmax.f32 %v2186, 0.0
        %v2219 = vmax.f32 %v2187, 0.0
        %v2220 = vmax.f32 %v2188, 0.0
        %v2221 = vmax.f32 %v2189, 0.0
        %v2222 = vmax.f32 %v2190, 0.0
        %v2223 = vmax.f32 %v2191, 0.0
        %v2224 = vmax.f32 %v2192, 0.0
        %v2225 = vmax.f32 %v2193, 0.0
        %v2226 = vmax.f32 %v2194, 0.0
        %v2227 = vmax.f32 %v2195, 0.0
        %v2228 = vmax.f32 %v2196, 0.0
        %v2229 = vmax.f32 %v2197, 0.0
        %v2230 = vmax.f32 %v2198, 0.0
        %v2231 = vmax.f32 %v2199, 0.0
        %v2232 = vmax.f32 %v2200, 0.0
        %v2233 = vmax.f32 %v2201, 0.0
        %v2234 = vmax.f32 %v2202, 0.0
        %v2235 = vmax.f32 %v2203, 0.0
        %v2236 = vmax.f32 %v2204, 0.0
        %v2237 = vmax.f32 %v2205, 0.0
        %v2238 = vmax.f32 %v2206, 0.0
        %v2239 = vmax.f32 %v2207, 0.0
        %v2240 = vpack.c.bf16 %v2210, %v2208
        %v2241 = vpack.c.bf16 %v2211, %v2209
        %v2242 = vpack.c.bf16 %v2214, %v2212
        %v2243 = vpack.c.bf16 %v2215, %v2213
        %v2244 = vpack.c.bf16 %v2218, %v2216
        %v2245 = vpack.c.bf16 %v2219, %v2217
        %v2246 = vpack.c.bf16 %v2222, %v2220
        %v2247 = vpack.c.bf16 %v2223, %v2221
        %v2248 = vpack.c.bf16 %v2226, %v2224
        %v2249 = vpack.c.bf16 %v2227, %v2225
        %v2250 = vpack.c.bf16 %v2230, %v2228
        %v2251 = vpack.c.bf16 %v2231, %v2229
        %v2252 = vpack.c.bf16 %v2234, %v2232
        %v2253 = vpack.c.bf16 %v2235, %v2233
        %v2254 = vpack.c.bf16 %v2238, %v2236
        %v2255 = vpack.c.bf16 %v2239, %v2237
        %2256 = vset.pattern.permute.xlu0 6
        %2257 = vperm.xlu0 %2256, %v411
        %v2258 = vpop.permute.xlu0 %2257
        %2260 = vset.pattern.permute.xlu0 6
        %2261 = vperm.xlu0 %2260, %v412
        %v2262 = vpop.permute.xlu0 %2261
        %2264 = vset.pattern.permute.xlu0 6
        %2265 = vperm.xlu0 %2264, %v413
        %v2266 = vpop.permute.xlu0 %2265
        %2268 = vset.pattern.permute.xlu0 6
        %2269 = vperm.xlu0 %2268, %v414
        %v2270 = vpop.permute.xlu0 %2269
        %2272 = vset.pattern.permute.xlu0 6
        %2273 = vperm.xlu0 %2272, %v415
        %v2274 = vpop.permute.xlu0 %2273
        %2276 = vset.pattern.permute.xlu0 6
        %2277 = vperm.xlu0 %2276, %v416
        %v2278 = vpop.permute.xlu0 %2277
        %2280 = vset.pattern.permute.xlu0 6
        %2281 = vperm.xlu0 %2280, %v417
        %v2282 = vpop.permute.xlu0 %2281
        %2284 = vset.pattern.permute.xlu0 6
        %2285 = vperm.xlu0 %2284, %v418
        %v2286 = vpop.permute.xlu0 %2285
        %v2296 = vunpack.c.l.b16 %v361
        %v2297 = vunpack.c.l.b16 %v362
        %v2298 = vunpack.c.l.b16 %v363
        %v2299 = vunpack.c.l.b16 %v364
        %v2300 = vunpack.c.l.b16 %v365
        %v2301 = vunpack.c.l.b16 %v366
        %v2302 = vunpack.c.l.b16 %v367
        %v2303 = vunpack.c.l.b16 %v368
        %v2304 = vpack.c.b16 %v2297, %v2296
        %v2305 = vpack.c.b16 %v2299, %v2298
        %v2306 = vpack.c.b16 %v2301, %v2300
        %v2307 = vpack.c.b16 %v2303, %v2302
        %2312 = vmatpush.bf16.msra.mxu0 %v2254
        %2313 = vmatpush.bf16.msra.mxu0 %v2252
        %2314 = vmatpush.bf16.msra.mxu0 %v2250
        %2315 = vmatpush.bf16.msra.mxu0 %v2248
        %2316 = vmatpush.bf16.msra.mxu0 %v2246
        %2317 = vmatpush.bf16.msra.mxu0 %v2244
        %2318 = vmatpush.bf16.msra.mxu0 %v2242
        %2319 = vmatpush.bf16.msra.mxu0 %v2240
        %2320 = vmatmul.bf16.gmra.mxu0 %v2304
        %v2321 = vpop.f32.mrf.mxu0
        %v2322 = vadd.f32 %v2258, %v2321
        %v2323 = vpop.f32.mrf.mxu0
        %v2324 = vadd.f32 %v2262, %v2323
        %2325 = vmatmul.bf16.gmra.mxu0 %v2305
        %v2326 = vpop.f32.mrf.mxu0
        %v2327 = vadd.f32 %v2266, %v2326
        %v2328 = vpop.f32.mrf.mxu0
        %v2329 = vadd.f32 %v2270, %v2328
        %2330 = vmatmul.bf16.gmra.mxu0 %v2306
        %v2331 = vpop.f32.mrf.mxu0
        %v2332 = vadd.f32 %v2274, %v2331
        %v2333 = vpop.f32.mrf.mxu0
        %v2334 = vadd.f32 %v2278, %v2333
        %2335 = vmatmul.bf16.gmra.mxu0 %v2307
        %v2336 = vpop.f32.mrf.mxu0
        %v2337 = vadd.f32 %v2282, %v2336
        %v2338 = vpop.f32.mrf.mxu0
        %v2339 = vadd.f32 %v2286, %v2338
        %2340 = vdwg.mxu0
        %2341 = vmatpush.bf16.msra.mxu0 %v2255
        %2342 = vmatpush.bf16.msra.mxu0 %v2253
        %2343 = vmatpush.bf16.msra.mxu0 %v2251
        %2344 = vmatpush.bf16.msra.mxu0 %v2249
        %2345 = vmatpush.bf16.msra.mxu0 %v2247
        %2346 = vmatpush.bf16.msra.mxu0 %v2245
        %2347 = vmatpush.bf16.msra.mxu0 %v2243
        %2348 = vmatpush.bf16.msra.mxu0 %v2241
        %2349 = vmatmul.bf16.gmra.mxu0 %v2304
        %v2350 = vpop.f32.mrf.mxu0
        %v2351 = vadd.f32 %v2258, %v2350
        %v2352 = vpop.f32.mrf.mxu0
        %v2353 = vadd.f32 %v2262, %v2352
        %2354 = vmatmul.bf16.gmra.mxu0 %v2305
        %v2355 = vpop.f32.mrf.mxu0
        %v2356 = vadd.f32 %v2266, %v2355
        %v2357 = vpop.f32.mrf.mxu0
        %v2358 = vadd.f32 %v2270, %v2357
        %2359 = vmatmul.bf16.gmra.mxu0 %v2306
        %v2360 = vpop.f32.mrf.mxu0
        %v2361 = vadd.f32 %v2274, %v2360
        %v2362 = vpop.f32.mrf.mxu0
        %v2363 = vadd.f32 %v2278, %v2362
        %2364 = vmatmul.bf16.gmra.mxu0 %v2307
        %v2365 = vpop.f32.mrf.mxu0
        %v2366 = vadd.f32 %v2282, %v2365
        %v2367 = vpop.f32.mrf.mxu0
        %v2368 = vadd.f32 %v2286, %v2367
        %2369 = vdwg.mxu0
        %v2370 = vmax.f32 %v2322, 0.0
        %v2371 = vmax.f32 %v2351, 0.0
        %v2372 = vmax.f32 %v2324, 0.0
        %v2373 = vmax.f32 %v2353, 0.0
        %v2374 = vmax.f32 %v2327, 0.0
        %v2375 = vmax.f32 %v2356, 0.0
        %v2376 = vmax.f32 %v2329, 0.0
        %v2377 = vmax.f32 %v2358, 0.0
        %v2378 = vmax.f32 %v2332, 0.0
        %v2379 = vmax.f32 %v2361, 0.0
        %v2380 = vmax.f32 %v2334, 0.0
        %v2381 = vmax.f32 %v2363, 0.0
        %v2382 = vmax.f32 %v2337, 0.0
        %v2383 = vmax.f32 %v2366, 0.0
        %v2384 = vmax.f32 %v2339, 0.0
        %v2385 = vmax.f32 %v2368, 0.0
        %v2386 = vpack.c.bf16 %v2372, %v2370
        %v2387 = vpack.c.bf16 %v2373, %v2371
        %v2388 = vpack.c.bf16 %v2376, %v2374
        %v2389 = vpack.c.bf16 %v2377, %v2375
        %v2390 = vpack.c.bf16 %v2380, %v2378
        %v2391 = vpack.c.bf16 %v2381, %v2379
        %v2392 = vpack.c.bf16 %v2384, %v2382
        %v2393 = vpack.c.bf16 %v2385, %v2383
        %2394 = vset.pattern.permute.xlu0 7
        %2395 = vperm.xlu0 %2394, %v411
        %v2396 = vpop.permute.xlu0 %2395
        %v2399 = vsel %vm746, %v386, 0
        %2401 = vmatpush.bf16.msra.mxu0 0
        %2402 = vmatpush.bf16.msra.mxu0 0
        %2403 = vmatpush.bf16.msra.mxu0 0
        %2404 = vmatpush.bf16.msra.mxu0 0
        %2405 = vmatpush.bf16.msra.mxu0 %v2392
        %2406 = vmatpush.bf16.msra.mxu0 %v2390
        %2407 = vmatpush.bf16.msra.mxu0 %v2388
        %2408 = vmatpush.bf16.msra.mxu0 %v2386
        %2409 = vmatmul.bf16.gmra.mxu0 %v2399
        %v2410 = vpop.f32.mrf.mxu0
        %v2411 = vadd.f32 %v2396, %v2410
        %v2412 = vpop.f32.mrf.mxu0
        %2413 = vdwg.mxu0
        %2414 = vmatpush.bf16.msra.mxu0 0
        %2415 = vmatpush.bf16.msra.mxu0 0
        %2416 = vmatpush.bf16.msra.mxu0 0
        %2417 = vmatpush.bf16.msra.mxu0 0
        %2418 = vmatpush.bf16.msra.mxu0 %v2393
        %2419 = vmatpush.bf16.msra.mxu0 %v2391
        %2420 = vmatpush.bf16.msra.mxu0 %v2389
        %2421 = vmatpush.bf16.msra.mxu0 %v2387
        %2422 = vmatmul.bf16.gmra.mxu0 %v2399
        %v2423 = vpop.f32.mrf.mxu0
        %v2424 = vadd.f32 %v2396, %v2423
        %v2425 = vpop.f32.mrf.mxu0
        %2426 = vdwg.mxu0
        %v2429 = vrot.slane %v2424, 4
        %vm2430 = vcmask 1043456
        %v2431 = vsel %vm2430, %v2411, %v2429
        %2433 = vst [vmem:[%s302] sm:$0x77] %v2431
        %p2434 = scmp.lt.s32.totalorder %s23, 1
        %s2435 = scalar_select %p2434, %s23, 1
        %s2436 = smul.addr %s2435, 2
        %s2437 = smul.addr %s2436, 4
        %s2438 = scalar_lea.vmem %s6, %s2437
        %s2439 = sand.u32 %s188, 1
        %s2440 = scalar_lea.sflag [#allocation4], %s2439
        %s2441 = sand.u32 %s188, 1
        %s2442 = scalar_lea.vmem [#allocation5], %s2441
        // Predicated region
        $region49: #{reconstruction_net_forward.1} parent=43 // pred_check
          %p2443 = pneg %p172
        $region50: #{reconstruction_net_forward.1} parent=43 // pred_check_branch
          %2445 = sbr.rel (%p2443) target = $region52
        $region51: #{reconstruction_net_forward.1} parent=43 // pred_region
          _
        $region52: #{reconstruction_net_forward.1} parent=43 // pred_fallthru
          _
        // Predicated region
        $region53: #{reconstruction_net_forward.1} parent=43 // pred_check
          %p2446 = pneg %p198
        $region54: #{reconstruction_net_forward.1} parent=43 // pred_check_branch
          %2448 = sbr.rel (%p2446) target = $region56
        $region55: #{reconstruction_net_forward.1} parent=43 // pred_region
          %2450 = vsyncadd %s2440, 0
          %s2451 = scalar_lea.hbm %s7, %s23
          %s2453 = sshll.u32 %s2442, 4
          %s2454 = int_to_ptr.vmem [resolvable:$true] %s2453
          %s2455 = sshll.u32 %s2451, 4
          %s2456 = int_to_ptr.hbm [resolvable:$true] %s2455
          %2458 = dma.vmem_to_hbm [thread:$0]  %s2454, 16, %s2456, %s2440
        $region56: #{reconstruction_net_forward.1} parent=43 // pred_fallthru
          _
      $region44: #{reconstruction_net_forward.1} parent=5 // pred_fallthru
        _
      %p2459 = scmp.le.s32.totalorder 2, %s18
      // Predicated region
      $region57: #{reconstruction_net_forward.1} parent=5 // pred_check
        %p2460 = pneg %p2459
      $region58: #{reconstruction_net_forward.1} parent=5 // pred_check_branch
        %2462 = sbr.rel (%p2460) target = $region60
      $region59: #{reconstruction_net_forward.1} parent=5 // pred_region
        %s2463 = ssub.s32 %s18, 2
        // Predicated region
        $region61: #{reconstruction_net_forward.1} parent=59 // pred_check
          %p2464 = pneg %p178
        $region62: #{reconstruction_net_forward.1} parent=59 // pred_check_branch
          %2466 = sbr.rel (%p2464) target = $region64
        $region63: #{reconstruction_net_forward.1} parent=59 // pred_region
          %p2467 = scmp.lt.s32.totalorder %s24, 1
          %s2468 = scalar_select %p2467, %s24, 1
          %s2469 = smul.addr %s2468, 2
          %s2470 = smul.addr %s2469, 4
          %s2471 = scalar_lea.vmem %s6, %s2470
        $region64: #{reconstruction_net_forward.1} parent=59 // pred_fallthru
          _
        // Predicated region
        $region65: #{reconstruction_net_forward.1} parent=59 // pred_check
          %p2472 = pneg %p204
        $region66: #{reconstruction_net_forward.1} parent=59 // pred_check_branch
          %2474 = sbr.rel (%p2472) target = $region68
        $region67: #{reconstruction_net_forward.1} parent=59 // pred_region
          %s2475 = sand.u32 %s189, 1
          %s2476 = scalar_lea.sflag [#allocation4], %s2475
          %s2477 = sand.u32 %s189, 1
          %s2478 = scalar_lea.vmem [#allocation5], %s2477
          %2480 = dma.done %s2476, 16
        $region68: #{reconstruction_net_forward.1} parent=59 // pred_fallthru
          _
      $region60: #{reconstruction_net_forward.1} parent=5 // pred_fallthru
        _
    $region6: #{reconstruction_net_forward.1} parent=1 // loop_footer
      %s22 = sadd.s32 1, %s18
    $region7: #{reconstruction_net_forward.1} parent=1 // loop_footer_branch
      %17 = sbr.rel target = $region3
    $region8: #{reconstruction_net_forward.1} parent=1 // loop_exit
      _
    %2481 = vsyncpa [#allocation3], 1
    %s2482 = scalar_lea.sflag [#allocation3], 1
    %2483 = vsyncpa %s2482, 1
    %2484 = vsyncpa [#allocation4], 1
    %s2485 = scalar_lea.sflag [#allocation4], 1
    %2486 = vsyncpa %s2485, 1

</llo_original>
